<compile_context>
chip_gen: v7x
topology: tpu7x:2x2x1
jax: 0.10.0
libtpu: 0.0.40
codegen_flags: <defaults>
</compile_context>

<pallas_src>
import functools

import jax
import jax.numpy as jnp
from jax import lax
from jax.experimental import pallas as pl
from jax.experimental.pallas import tpu as pltpu


# ---------------------------------------------------------------------------
# Fused SPPF kernel: one (batch, row-tile) grid step.
#   Layout: channels on sublanes, flattened (rows*W) on lanes.
# ---------------------------------------------------------------------------
def _sppf_fused_kernel(col_ref, rowloc_ref, x_ref, w1t_ref, b1_ref, w2t_ref, b2_ref,
                       o_ref, cat_ref, *, H, W, K, tile_rows, halo, approx_silu):
    ext_rows = tile_rows + 2 * halo          # rows processed (tile + halo both sides)
    ext_len = ext_rows * W
    tile_len = tile_rows * W
    int_lo = halo * W                        # start of the interior (output) rows
    r = pl.program_id(1)

    pool_dtype = x_ref.dtype
    neg = float(jnp.finfo(pool_dtype).min)   # acts as -inf for the max pool

    def silu(v):                             # v is float32; divide goes to the EUP
        return v * pl.reciprocal(1.0 + jnp.exp(-v), approx=approx_silu)

    # ---- masks: computed once, shared by the 3 cascaded pools -----------------
    col = col_ref[...]                       # (1, ext_len) int32: image column
    rloc = rowloc_ref[...]                   # (1, ext_len) int32: window-local row
    hmask, vmask = [], []
    for d in range(1, K // 2 + 1):
        hmask.append((col < (W - d), col >= d))            # take-from col+d / col-d
        vmask.append((rloc < (ext_rows - d), rloc >= d))    # take-from row+d / row-d
    # window rows outside the real image behave as -inf for the pool
    pad_row = rloc + r * tile_rows
    row_valid = (pad_row >= halo) & (pad_row < (H + halo))

    # ---- cv1: 1x1 conv (BN folded into weights) + bias + SiLU  (MXU + EUP) ----
    start = r * tile_len
    if tile_len % 128 == 0:
        start = pl.multiple_of(start, 128)
    xw = x_ref[0, :, pl.ds(start, ext_len)]                  # (Cin, ext_len)
    z = lax.dot_general(w1t_ref[...], xw, (((1,), (0,)), ((), ())),
                        preferred_element_type=jnp.float32)  # (c_, ext_len) f32
    t = silu(z + b1_ref[...]).astype(pool_dtype)
    t = jnp.where(row_valid, t, neg)                         # out-of-image rows -> -inf
    c_ = t.shape[0]
    cat_ref[0:c_, :] = t[:, int_lo:int_lo + tile_len]        # group 0 of the concat

    # ---- three cascaded KxK stride-1 "same" max pools (separable roll+mask) ---
    def pool(a):
        h = a
        for i, d in enumerate(range(1, K // 2 + 1)):
            mp, mn = hmask[i]
            h = jnp.maximum(h, jnp.where(mp, pltpu.roll(a, (-d) % ext_len, axis=1), neg))
            h = jnp.maximum(h, jnp.where(mn, pltpu.roll(a, d, axis=1), neg))
        v = h
        for i, d in enumerate(range(1, K // 2 + 1)):
            mp, mn = vmask[i]
            v = jnp.maximum(v, jnp.where(mp, pltpu.roll(h, (-d * W) % ext_len, axis=1), neg))
            v = jnp.maximum(v, jnp.where(mn, pltpu.roll(h, d * W, axis=1), neg))
        return v

    y = t
    for g in range(1, 4):
        y = pool(y)
        cat_ref[g * c_:(g + 1) * c_, :] = y[:, int_lo:int_lo + tile_len]

    # ---- cv2 on concat([t, y1, y2, y3], ch) as ONE K=4*c_ MXU matmul ----------
    acc = lax.dot_general(w2t_ref[...], cat_ref[...], (((1,), (0,)), ((), ())),
                          preferred_element_type=jnp.float32)  # (Cout, tile_len)
    o_ref[0] = silu(acc + b2_ref[...]).astype(o_ref.dtype)


# ---------------------------------------------------------------------------
# Wrapper
# ---------------------------------------------------------------------------
def sppf_forward(x_nchw, params, pool_ksize=5, compute_dtype=None, approx_silu=True):
    """x_nchw: (N, Cin, H, W).  Returns (N, Cout, H, W) in compute_dtype."""
    N, Cin, H, W = x_nchw.shape
    c_ = params["w1t"].shape[0]
    Cout = params["w2t"].shape[0]
    K = pool_ksize

    if compute_dtype is None:
        # bf16 activations/weights on v6e/v7x (f32 MXU accumulation, f32 SiLU);
        # f32 elsewhere (v5e has no bf16 VALU).
        kind = jax.devices()[0].device_kind.lower()
        compute_dtype = jnp.bfloat16 if ("v6" in kind or "v7" in kind) else jnp.float32
    compute_dtype = jnp.dtype(compute_dtype)

    # ---- choose row tile and halo (lane-dense: multiples of 128 lanes) --------
    base_halo = 3 * (K // 2)                       # 3 cascaded pools x K//2 rows
    divs = [d for d in range(1, H + 1) if H % d == 0 and (d * W) % 128 == 0]
    tile_rows = H                                  # fallback: whole image per step
    for lo in (max(8, 4 * base_halo), 8, 1):       # amortize halo recompute
        cand = [d for d in divs if d >= lo]
        if cand:
            tile_rows = cand[0]
            break
    R = H // tile_rows
    halo = 0
    if R > 1:                                      # align halo*W to 128 if possible
        halo = next((h for h in range(base_halo, base_halo + 33)
                     if (h * W) % 128 == 0), base_halo)

    Hpad, ext_rows = H + 2 * halo, tile_rows + 2 * halo
    Lpad, ext_len, tile_len = Hpad * W, ext_rows * W, tile_rows * W

    xd = x_nchw.astype(compute_dtype)
    if halo:
        xd = jnp.pad(xd, ((0, 0), (0, 0), (halo, halo), (0, 0)))  # pad rows; masked in-kernel
    x_flat = xd.reshape(N, Cin, Lpad)              # free reshape, stays NCHW

    w1t = params["w1t"].astype(compute_dtype)      # (c_, Cin)
    w2t = params["w2t"].astype(compute_dtype)      # (Cout, 4*c_)
    b1 = params["b1"].astype(jnp.float32)          # (c_, 1)
    b2 = params["b2"].astype(jnp.float32)          # (Cout, 1)

    idx = jnp.arange(ext_len, dtype=jnp.int32)     # precomputed: no in-kernel % / //
    col_ids = (idx % W).reshape(1, ext_len)
    row_loc = (idx // W).reshape(1, ext_len)

    # explicit VMEM limit (rough per-step footprint estimate, with headroom)
    isz = compute_dtype.itemsize
    est = (2 * Cin * Lpad * isz + 2 * Cout * tile_len * isz + 4 * c_ * tile_len * isz
           + 10 * c_ * ext_len * 4 + 2 * (c_ * Cin + 4 * c_ * Cout) * isz + (1 << 16))
    vmem_limit = int(min(max(2 * est, 32 << 20), 64 << 20))

    kernel = functools.partial(_sppf_fused_kernel, H=H, W=W, K=K,
                               tile_rows=tile_rows, halo=halo, approx_silu=approx_silu)
    out = pl.pallas_call(
        kernel,
        out_shape=jax.ShapeDtypeStruct((N, Cout, H * W), compute_dtype),
        grid=(N, R),
        in_specs=[
            pl.BlockSpec((1, ext_len), lambda b, r: (0, 0)),        # col ids
            pl.BlockSpec((1, ext_len), lambda b, r: (0, 0)),        # window-row ids
            pl.BlockSpec((1, Cin, Lpad), lambda b, r: (b, 0, 0)),   # resident over r
            pl.BlockSpec((c_, Cin), lambda b, r: (0, 0)),
            pl.BlockSpec((c_, 1), lambda b, r: (0, 0)),
            pl.BlockSpec((Cout, 4 * c_), lambda b, r: (0, 0)),
            pl.BlockSpec((Cout, 1), lambda b, r: (0, 0)),
        ],
        out_specs=pl.BlockSpec((1, Cout, tile_len), lambda b, r: (b, 0, r)),
        scratch_shapes=[pltpu.VMEM((4 * c_, tile_len), compute_dtype)],
        compiler_params=pltpu.CompilerParams(
            dimension_semantics=("parallel", "parallel"),
            vmem_limit_bytes=vmem_limit),
    )(col_ids, row_loc, x_flat, w1t, b1, w2t, b2)

    return out.reshape(N, Cout, H, W)


# ---------------------------------------------------------------------------
# Synthetic parameters: eval-mode BatchNorm folded into the 1x1 conv weights
# ---------------------------------------------------------------------------
def _make_folded_conv_bn(key, cin, cout):
    k1, k2, k3, k4, k5 = jax.random.split(key, 5)
    w = jax.random.normal(k1, (cin, cout), jnp.float32) / jnp.sqrt(cin)
    gamma = 1.0 + 0.1 * jax.random.normal(k2, (cout,), jnp.float32)
    beta = 0.1 * jax.random.normal(k3, (cout,), jnp.float32)
    mean = 0.1 * jax.random.normal(k4, (cout,), jnp.float32)
    var = jnp.abs(jax.random.normal(k5, (cout,), jnp.float32)) + 0.5
    eps = 1e-5
    scale = gamma / jnp.sqrt(var + eps)
    return w * scale[None, :], beta - mean * scale      # folded weight, bias


def init_sppf(key, in_channels, out_channels):
    c_ = in_channels // 2
    k1, k2 = jax.random.split(key)
    w1, b1 = _make_folded_conv_bn(k1, in_channels, c_)          # cv1
    w2, b2 = _make_folded_conv_bn(k2, 4 * c_, out_channels)     # cv2
    return {
        "w1t": jnp.transpose(w1),                 # (c_, Cin)
        "b1": b1.reshape(c_, 1),
        "w2t": jnp.transpose(w2),                 # (Cout, 4*c_) matches concat order
        "b2": b2.reshape(out_channels, 1),
        # raw (BN-folded) forms for the pure-JAX reference
        "w1_raw": w1, "b1_raw": b1, "w2_raw": w2, "b2_raw": b2,
    }


# ---------------------------------------------------------------------------
# Pure-JAX reference (correctness check only)
# ---------------------------------------------------------------------------
def _ref_forward(x_nchw, params, pool_ksize=5):
    def conv1x1_silu(x, w, b):
        y = lax.conv_general_dilated(
            x, w.reshape(1, 1, w.shape[0], w.shape[1]), (1, 1),
            [(0, 0), (0, 0)], dimension_numbers=("NCHW", "HWIO", "NCHW"))
        return jax.nn.silu(y + b.reshape(1, -1, 1, 1))

    def mp(x):
        p = pool_ksize // 2
        return lax.reduce_window(x, -jnp.inf, lax.max,
                                 (1, 1, pool_ksize, pool_ksize), (1, 1, 1, 1),
                                 [(0, 0), (0, 0), (p, p), (p, p)])

    t = conv1x1_silu(x_nchw.astype(jnp.float32), params["w1_raw"], params["b1_raw"])
    y1 = mp(t); y2 = mp(y1); y3 = mp(y2)
    return conv1x1_silu(jnp.concatenate([t, y1, y2, y3], 1),
                        params["w2_raw"], params["b2_raw"])


# ---------------------------------------------------------------------------
if __name__ == "__main__":
    key = jax.random.PRNGKey(0)
    k_param, k_x = jax.random.split(key)

    in_channels, out_channels = 8, 8          # c_ = in_channels // 2 = 4
    N, H, W = 2, 16, 16
    pool_ksize = 5

    params = init_sppf(k_param, in_channels, out_channels)
    x = jax.random.normal(k_x, (N, in_channels, H, W), jnp.float32)
    ref = jax.block_until_ready(_ref_forward(x, params, pool_ksize))
    ref_max = float(jnp.max(jnp.abs(ref))) + 1e-6

    # 1) f32 + exact reciprocal: tight check of masks / pooling / BN fold / layout.
    out = jax.block_until_ready(
        sppf_forward(x, params, pool_ksize, compute_dtype=jnp.float32, approx_silu=False))
    assert out.shape == (N, out_channels, H, W), out.shape
    err = float(jnp.max(jnp.abs(out - ref)))
    assert err < 3e-3, err

    # 2) f32 + EUP approximate reciprocal (default perf path): looser tolerance.
    out_a = jax.block_until_ready(
        sppf_forward(x, params, pool_ksize, compute_dtype=jnp.float32, approx_silu=True))
    rel_a = float(jnp.max(jnp.abs(out_a - ref))) / ref_max
    assert rel_a < 5e-2, rel_a

    # 3) bf16 activations/weights (v6e/v7x path), f32 accumulation: looser tolerance.
    out_b = jax.block_until_ready(
        sppf_forward(x, params, pool_ksize, compute_dtype=jnp.bfloat16, approx_silu=True))
    rel_b = float(jnp.max(jnp.abs(out_b.astype(jnp.float32) - ref))) / ref_max
    assert rel_b < 1e-1, rel_b

    print("KERNEL_OK")
</pallas_src>

<mosaic_0001>
module attributes {stable_mosaic.version = 11 : i64} {
  func.func @_sppf_fused_kernel(%arg0: i32, %arg1: i32, %arg2: memref<1x384xi32, #tpu.memory_space<vmem>>, %arg3: memref<1x384xi32, #tpu.memory_space<vmem>>, %arg4: memref<1x8x512xf32, #tpu.memory_space<vmem>>, %arg5: memref<4x8xf32, #tpu.memory_space<vmem>>, %arg6: memref<4x1xf32, #tpu.memory_space<vmem>>, %arg7: memref<8x16xf32, #tpu.memory_space<vmem>>, %arg8: memref<8x1xf32, #tpu.memory_space<vmem>>, %arg9: memref<1x8x128xf32, #tpu.memory_space<vmem>>, %arg10: memref<16x128xf32, #tpu.memory_space<vmem>>) attributes {dimension_semantics = [#tpu.dimension_semantics<parallel>, #tpu.dimension_semantics<parallel>], iteration_bounds = array<i64: 2, 2>, scalar_prefetch = 0 : i64, scratch_operands = 1 : i64, tpu.core_type = #tpu.core_type<tc>, window_params = [{pipeline_mode = #tpu.pipeline_mode<synchronous>, transform_indices = @transform_0, window_bounds = array<i64: 1, 384>}, {pipeline_mode = #tpu.pipeline_mode<synchronous>, transform_indices = @transform_1, window_bounds = array<i64: 1, 384>}, {transform_indices = @transform_2, window_bounds = array<i64: 1, 8, 512>}, {pipeline_mode = #tpu.pipeline_mode<synchronous>, transform_indices = @transform_3, window_bounds = array<i64: 4, 8>}, {pipeline_mode = #tpu.pipeline_mode<synchronous>, transform_indices = @transform_4, window_bounds = array<i64: 4, 1>}, {pipeline_mode = #tpu.pipeline_mode<synchronous>, transform_indices = @transform_5, window_bounds = array<i64: 8, 16>}, {pipeline_mode = #tpu.pipeline_mode<synchronous>, transform_indices = @transform_6, window_bounds = array<i64: 8, 1>}, {transform_indices = @transform_7, window_bounds = array<i64: 1, 8, 128>}]} {
    %c0 = arith.constant 0 : index
    %c0_0 = arith.constant 0 : index
    %0 = vector.load %arg2[%c0, %c0_0] : memref<1x384xi32, #tpu.memory_space<vmem>>, vector<1x384xi32>
    %c0_1 = arith.constant 0 : index
    %c0_2 = arith.constant 0 : index
    %1 = vector.load %arg3[%c0_1, %c0_2] : memref<1x384xi32, #tpu.memory_space<vmem>>, vector<1x384xi32>
    %c15_i32 = arith.constant 15 : i32
    %2 = vector.broadcast %c15_i32 : i32 to vector<1x384xi32>
    %3 = arith.cmpi slt, %0, %2 : vector<1x384xi32>
    %c1_i32 = arith.constant 1 : i32
    %4 = vector.broadcast %c1_i32 : i32 to vector<1x384xi32>
    %5 = arith.cmpi sge, %0, %4 : vector<1x384xi32>
    %c23_i32 = arith.constant 23 : i32
    %6 = vector.broadcast %c23_i32 : i32 to vector<1x384xi32>
    %7 = arith.cmpi slt, %1, %6 : vector<1x384xi32>
    %c1_i32_3 = arith.constant 1 : i32
    %8 = vector.broadcast %c1_i32_3 : i32 to vector<1x384xi32>
    %9 = arith.cmpi sge, %1, %8 : vector<1x384xi32>
    %c14_i32 = arith.constant 14 : i32
    %10 = vector.broadcast %c14_i32 : i32 to vector<1x384xi32>
    %11 = arith.cmpi slt, %0, %10 : vector<1x384xi32>
    %c2_i32 = arith.constant 2 : i32
    %12 = vector.broadcast %c2_i32 : i32 to vector<1x384xi32>
    %13 = arith.cmpi sge, %0, %12 : vector<1x384xi32>
    %c22_i32 = arith.constant 22 : i32
    %14 = vector.broadcast %c22_i32 : i32 to vector<1x384xi32>
    %15 = arith.cmpi slt, %1, %14 : vector<1x384xi32>
    %c2_i32_4 = arith.constant 2 : i32
    %16 = vector.broadcast %c2_i32_4 : i32 to vector<1x384xi32>
    %17 = arith.cmpi sge, %1, %16 : vector<1x384xi32>
    %c8_i32 = arith.constant 8 : i32
    %18 = arith.muli %arg1, %c8_i32 : i32
    %19 = vector.broadcast %18 : i32 to vector<1x384xi32>
    %20 = arith.addi %1, %19 : vector<1x384xi32>
    %c8_i32_5 = arith.constant 8 : i32
    %21 = vector.broadcast %c8_i32_5 : i32 to vector<1x384xi32>
    %22 = arith.cmpi sge, %20, %21 : vector<1x384xi32>
    %c24_i32 = arith.constant 24 : i32
    %23 = vector.broadcast %c24_i32 : i32 to vector<1x384xi32>
    %24 = arith.cmpi slt, %20, %23 : vector<1x384xi32>
    %25 = arith.andi %22, %24 : vector<1x384xi1>
    %c128_i32 = arith.constant 128 : i32
    %26 = arith.muli %arg1, %c128_i32 : i32
    %27 = tpu.assume_multiple %26, 128 : i32
    %c0_6 = arith.constant 0 : index
    %c0_7 = arith.constant 0 : index
    %28 = arith.index_cast %27 : i32 to index
    %29 = vector.load %arg4[%c0_6, %c0_7, %28] : memref<1x8x512xf32, #tpu.memory_space<vmem>>, vector<1x8x384xf32>
    %30 = vector.shape_cast %29 : vector<1x8x384xf32> to vector<8x384xf32>
    %c0_8 = arith.constant 0 : index
    %c0_9 = arith.constant 0 : index
    %31 = vector.load %arg5[%c0_8, %c0_9] : memref<4x8xf32, #tpu.memory_space<vmem>>, vector<4x8xf32>
    %cst = arith.constant dense<0.000000e+00> : vector<4x384xf32>
    %32 = tpu.matmul %31, %30, %cst {dimension_numbers = #tpu.dot_dimension_numbers<[1], [0], [0], [1], [0, 0, 1, 1], [], []>} : vector<4x8xf32>, vector<8x384xf32>, vector<4x384xf32> -> vector<4x384xf32>
    %c0_10 = arith.constant 0 : index
    %c0_11 = arith.constant 0 : index
    %33 = vector.load %arg6[%c0_10, %c0_11] : memref<4x1xf32, #tpu.memory_space<vmem>>, vector<4x1xf32>
    %34 = vector.broadcast %33 : vector<4x1xf32> to vector<4x384xf32>
    %35 = arith.addf %32, %34 : vector<4x384xf32>
    %cst_12 = arith.constant 0.000000e+00 : f32
    %36 = vector.broadcast %cst_12 : f32 to vector<4x384xf32>
    %37 = arith.subf %36, %35 : vector<4x384xf32>
    %38 = math.exp %37 : vector<4x384xf32>
    %cst_13 = arith.constant 1.000000e+00 : f32
    %39 = vector.broadcast %cst_13 : f32 to vector<4x384xf32>
    %40 = arith.addf %39, %38 : vector<4x384xf32>
    %41 = tpu.reciprocal %40 : vector<4x384xf32> -> vector<4x384xf32>
    %42 = arith.mulf %35, %41 : vector<4x384xf32>
    %cst_14 = arith.constant -3.40282347E+38 : f32
    %43 = vector.shape_cast %25 : vector<1x384xi1> to vector<1x384xi1>
    %44 = vector.broadcast %43 : vector<1x384xi1> to vector<4x384xi1>
    %45 = vector.broadcast %cst_14 : f32 to vector<4x384xf32>
    %46 = arith.select %44, %42, %45 : vector<4x384xi1>, vector<4x384xf32>
    %47 = vector.extract_strided_slice %46 {offsets = [0, 128], sizes = [4, 128], strides = [1, 1]} : vector<4x384xf32> to vector<4x128xf32>
    %c0_15 = arith.constant 0 : index
    %c0_16 = arith.constant 0 : index
    %48 = vector.load %arg10[%c0_15, %c0_16] : memref<16x128xf32, #tpu.memory_space<vmem>>, vector<4x128xf32>
    tpu.vector_store %arg10[%c0_15, %c0_16], %47 {strides = array<i32>} : memref<16x128xf32, #tpu.memory_space<vmem>>, vector<4x128xf32>,
    %c383_i32 = arith.constant 383 : i32
    %49 = tpu.dynamic_rotate %46 by %c383_i32 dim 1 : vector<4x384xf32>, i32 -> vector<4x384xf32>
    %cst_17 = arith.constant -3.40282347E+38 : f32
    %50 = vector.shape_cast %3 : vector<1x384xi1> to vector<1x384xi1>
    %51 = vector.broadcast %50 : vector<1x384xi1> to vector<4x384xi1>
    %52 = vector.broadcast %cst_17 : f32 to vector<4x384xf32>
    %53 = arith.select %51, %49, %52 : vector<4x384xi1>, vector<4x384xf32>
    %54 = arith.maximumf %46, %53 : vector<4x384xf32>
    %c1_i32_18 = arith.constant 1 : i32
    %55 = tpu.dynamic_rotate %46 by %c1_i32_18 dim 1 : vector<4x384xf32>, i32 -> vector<4x384xf32>
    %cst_19 = arith.constant -3.40282347E+38 : f32
    %56 = vector.shape_cast %5 : vector<1x384xi1> to vector<1x384xi1>
    %57 = vector.broadcast %56 : vector<1x384xi1> to vector<4x384xi1>
    %58 = vector.broadcast %cst_19 : f32 to vector<4x384xf32>
    %59 = arith.select %57, %55, %58 : vector<4x384xi1>, vector<4x384xf32>
    %60 = arith.maximumf %54, %59 : vector<4x384xf32>
    %c382_i32 = arith.constant 382 : i32
    %61 = tpu.dynamic_rotate %46 by %c382_i32 dim 1 : vector<4x384xf32>, i32 -> vector<4x384xf32>
    %cst_20 = arith.constant -3.40282347E+38 : f32
    %62 = vector.shape_cast %11 : vector<1x384xi1> to vector<1x384xi1>
    %63 = vector.broadcast %62 : vector<1x384xi1> to vector<4x384xi1>
    %64 = vector.broadcast %cst_20 : f32 to vector<4x384xf32>
    %65 = arith.select %63, %61, %64 : vector<4x384xi1>, vector<4x384xf32>
    %66 = arith.maximumf %60, %65 : vector<4x384xf32>
    %c2_i32_21 = arith.constant 2 : i32
    %67 = tpu.dynamic_rotate %46 by %c2_i32_21 dim 1 : vector<4x384xf32>, i32 -> vector<4x384xf32>
    %cst_22 = arith.constant -3.40282347E+38 : f32
    %68 = vector.shape_cast %13 : vector<1x384xi1> to vector<1x384xi1>
    %69 = vector.broadcast %68 : vector<1x384xi1> to vector<4x384xi1>
    %70 = vector.broadcast %cst_22 : f32 to vector<4x384xf32>
    %71 = arith.select %69, %67, %70 : vector<4x384xi1>, vector<4x384xf32>
    %72 = arith.maximumf %66, %71 : vector<4x384xf32>
    %c368_i32 = arith.constant 368 : i32
    %73 = tpu.dynamic_rotate %72 by %c368_i32 dim 1 : vector<4x384xf32>, i32 -> vector<4x384xf32>
    %cst_23 = arith.constant -3.40282347E+38 : f32
    %74 = vector.shape_cast %7 : vector<1x384xi1> to vector<1x384xi1>
    %75 = vector.broadcast %74 : vector<1x384xi1> to vector<4x384xi1>
    %76 = vector.broadcast %cst_23 : f32 to vector<4x384xf32>
    %77 = arith.select %75, %73, %76 : vector<4x384xi1>, vector<4x384xf32>
    %78 = arith.maximumf %72, %77 : vector<4x384xf32>
    %c16_i32 = arith.constant 16 : i32
    %79 = tpu.dynamic_rotate %72 by %c16_i32 dim 1 : vector<4x384xf32>, i32 -> vector<4x384xf32>
    %cst_24 = arith.constant -3.40282347E+38 : f32
    %80 = vector.shape_cast %9 : vector<1x384xi1> to vector<1x384xi1>
    %81 = vector.broadcast %80 : vector<1x384xi1> to vector<4x384xi1>
    %82 = vector.broadcast %cst_24 : f32 to vector<4x384xf32>
    %83 = arith.select %81, %79, %82 : vector<4x384xi1>, vector<4x384xf32>
    %84 = arith.maximumf %78, %83 : vector<4x384xf32>
    %c352_i32 = arith.constant 352 : i32
    %85 = tpu.dynamic_rotate %72 by %c352_i32 dim 1 : vector<4x384xf32>, i32 -> vector<4x384xf32>
    %cst_25 = arith.constant -3.40282347E+38 : f32
    %86 = vector.shape_cast %15 : vector<1x384xi1> to vector<1x384xi1>
    %87 = vector.broadcast %86 : vector<1x384xi1> to vector<4x384xi1>
    %88 = vector.broadcast %cst_25 : f32 to vector<4x384xf32>
    %89 = arith.select %87, %85, %88 : vector<4x384xi1>, vector<4x384xf32>
    %90 = arith.maximumf %84, %89 : vector<4x384xf32>
    %c32_i32 = arith.constant 32 : i32
    %91 = tpu.dynamic_rotate %72 by %c32_i32 dim 1 : vector<4x384xf32>, i32 -> vector<4x384xf32>
    %cst_26 = arith.constant -3.40282347E+38 : f32
    %92 = vector.shape_cast %17 : vector<1x384xi1> to vector<1x384xi1>
    %93 = vector.broadcast %92 : vector<1x384xi1> to vector<4x384xi1>
    %94 = vector.broadcast %cst_26 : f32 to vector<4x384xf32>
    %95 = arith.select %93, %91, %94 : vector<4x384xi1>, vector<4x384xf32>
    %96 = arith.maximumf %90, %95 : vector<4x384xf32>
    %97 = vector.extract_strided_slice %96 {offsets = [0, 128], sizes = [4, 128], strides = [1, 1]} : vector<4x384xf32> to vector<4x128xf32>
    %c4 = arith.constant 4 : index
    %c0_27 = arith.constant 0 : index
    %98 = vector.load %arg10[%c4, %c0_27] : memref<16x128xf32, #tpu.memory_space<vmem>>, vector<4x128xf32>
    tpu.vector_store %arg10[%c4, %c0_27], %97 {strides = array<i32>} : memref<16x128xf32, #tpu.memory_space<vmem>>, vector<4x128xf32>,
    %c383_i32_28 = arith.constant 383 : i32
    %99 = tpu.dynamic_rotate %96 by %c383_i32_28 dim 1 : vector<4x384xf32>, i32 -> vector<4x384xf32>
    %cst_29 = arith.constant -3.40282347E+38 : f32
    %100 = vector.shape_cast %3 : vector<1x384xi1> to vector<1x384xi1>
    %101 = vector.broadcast %100 : vector<1x384xi1> to vector<4x384xi1>
    %102 = vector.broadcast %cst_29 : f32 to vector<4x384xf32>
    %103 = arith.select %101, %99, %102 : vector<4x384xi1>, vector<4x384xf32>
    %104 = arith.maximumf %96, %103 : vector<4x384xf32>
    %c1_i32_30 = arith.constant 1 : i32
    %105 = tpu.dynamic_rotate %96 by %c1_i32_30 dim 1 : vector<4x384xf32>, i32 -> vector<4x384xf32>
    %cst_31 = arith.constant -3.40282347E+38 : f32
    %106 = vector.shape_cast %5 : vector<1x384xi1> to vector<1x384xi1>
    %107 = vector.broadcast %106 : vector<1x384xi1> to vector<4x384xi1>
    %108 = vector.broadcast %cst_31 : f32 to vector<4x384xf32>
    %109 = arith.select %107, %105, %108 : vector<4x384xi1>, vector<4x384xf32>
    %110 = arith.maximumf %104, %109 : vector<4x384xf32>
    %c382_i32_32 = arith.constant 382 : i32
    %111 = tpu.dynamic_rotate %96 by %c382_i32_32 dim 1 : vector<4x384xf32>, i32 -> vector<4x384xf32>
    %cst_33 = arith.constant -3.40282347E+38 : f32
    %112 = vector.shape_cast %11 : vector<1x384xi1> to vector<1x384xi1>
    %113 = vector.broadcast %112 : vector<1x384xi1> to vector<4x384xi1>
    %114 = vector.broadcast %cst_33 : f32 to vector<4x384xf32>
    %115 = arith.select %113, %111, %114 : vector<4x384xi1>, vector<4x384xf32>
    %116 = arith.maximumf %110, %115 : vector<4x384xf32>
    %c2_i32_34 = arith.constant 2 : i32
    %117 = tpu.dynamic_rotate %96 by %c2_i32_34 dim 1 : vector<4x384xf32>, i32 -> vector<4x384xf32>
    %cst_35 = arith.constant -3.40282347E+38 : f32
    %118 = vector.shape_cast %13 : vector<1x384xi1> to vector<1x384xi1>
    %119 = vector.broadcast %118 : vector<1x384xi1> to vector<4x384xi1>
    %120 = vector.broadcast %cst_35 : f32 to vector<4x384xf32>
    %121 = arith.select %119, %117, %120 : vector<4x384xi1>, vector<4x384xf32>
    %122 = arith.maximumf %116, %121 : vector<4x384xf32>
    %c368_i32_36 = arith.constant 368 : i32
    %123 = tpu.dynamic_rotate %122 by %c368_i32_36 dim 1 : vector<4x384xf32>, i32 -> vector<4x384xf32>
    %cst_37 = arith.constant -3.40282347E+38 : f32
    %124 = vector.shape_cast %7 : vector<1x384xi1> to vector<1x384xi1>
    %125 = vector.broadcast %124 : vector<1x384xi1> to vector<4x384xi1>
    %126 = vector.broadcast %cst_37 : f32 to vector<4x384xf32>
    %127 = arith.select %125, %123, %126 : vector<4x384xi1>, vector<4x384xf32>
    %128 = arith.maximumf %122, %127 : vector<4x384xf32>
    %c16_i32_38 = arith.constant 16 : i32
    %129 = tpu.dynamic_rotate %122 by %c16_i32_38 dim 1 : vector<4x384xf32>, i32 -> vector<4x384xf32>
    %cst_39 = arith.constant -3.40282347E+38 : f32
    %130 = vector.shape_cast %9 : vector<1x384xi1> to vector<1x384xi1>
    %131 = vector.broadcast %130 : vector<1x384xi1> to vector<4x384xi1>
    %132 = vector.broadcast %cst_39 : f32 to vector<4x384xf32>
    %133 = arith.select %131, %129, %132 : vector<4x384xi1>, vector<4x384xf32>
    %134 = arith.maximumf %128, %133 : vector<4x384xf32>
    %c352_i32_40 = arith.constant 352 : i32
    %135 = tpu.dynamic_rotate %122 by %c352_i32_40 dim 1 : vector<4x384xf32>, i32 -> vector<4x384xf32>
    %cst_41 = arith.constant -3.40282347E+38 : f32
    %136 = vector.shape_cast %15 : vector<1x384xi1> to vector<1x384xi1>
    %137 = vector.broadcast %136 : vector<1x384xi1> to vector<4x384xi1>
    %138 = vector.broadcast %cst_41 : f32 to vector<4x384xf32>
    %139 = arith.select %137, %135, %138 : vector<4x384xi1>, vector<4x384xf32>
    %140 = arith.maximumf %134, %139 : vector<4x384xf32>
    %c32_i32_42 = arith.constant 32 : i32
    %141 = tpu.dynamic_rotate %122 by %c32_i32_42 dim 1 : vector<4x384xf32>, i32 -> vector<4x384xf32>
    %cst_43 = arith.constant -3.40282347E+38 : f32
    %142 = vector.shape_cast %17 : vector<1x384xi1> to vector<1x384xi1>
    %143 = vector.broadcast %142 : vector<1x384xi1> to vector<4x384xi1>
    %144 = vector.broadcast %cst_43 : f32 to vector<4x384xf32>
    %145 = arith.select %143, %141, %144 : vector<4x384xi1>, vector<4x384xf32>
    %146 = arith.maximumf %140, %145 : vector<4x384xf32>
    %147 = vector.extract_strided_slice %146 {offsets = [0, 128], sizes = [4, 128], strides = [1, 1]} : vector<4x384xf32> to vector<4x128xf32>
    %c8 = arith.constant 8 : index
    %c0_44 = arith.constant 0 : index
    %148 = vector.load %arg10[%c8, %c0_44] : memref<16x128xf32, #tpu.memory_space<vmem>>, vector<4x128xf32>
    tpu.vector_store %arg10[%c8, %c0_44], %147 {strides = array<i32>} : memref<16x128xf32, #tpu.memory_space<vmem>>, vector<4x128xf32>,
    %c383_i32_45 = arith.constant 383 : i32
    %149 = tpu.dynamic_rotate %146 by %c383_i32_45 dim 1 : vector<4x384xf32>, i32 -> vector<4x384xf32>
    %cst_46 = arith.constant -3.40282347E+38 : f32
    %150 = vector.shape_cast %3 : vector<1x384xi1> to vector<1x384xi1>
    %151 = vector.broadcast %150 : vector<1x384xi1> to vector<4x384xi1>
    %152 = vector.broadcast %cst_46 : f32 to vector<4x384xf32>
    %153 = arith.select %151, %149, %152 : vector<4x384xi1>, vector<4x384xf32>
    %154 = arith.maximumf %146, %153 : vector<4x384xf32>
    %c1_i32_47 = arith.constant 1 : i32
    %155 = tpu.dynamic_rotate %146 by %c1_i32_47 dim 1 : vector<4x384xf32>, i32 -> vector<4x384xf32>
    %cst_48 = arith.constant -3.40282347E+38 : f32
    %156 = vector.shape_cast %5 : vector<1x384xi1> to vector<1x384xi1>
    %157 = vector.broadcast %156 : vector<1x384xi1> to vector<4x384xi1>
    %158 = vector.broadcast %cst_48 : f32 to vector<4x384xf32>
    %159 = arith.select %157, %155, %158 : vector<4x384xi1>, vector<4x384xf32>
    %160 = arith.maximumf %154, %159 : vector<4x384xf32>
    %c382_i32_49 = arith.constant 382 : i32
    %161 = tpu.dynamic_rotate %146 by %c382_i32_49 dim 1 : vector<4x384xf32>, i32 -> vector<4x384xf32>
    %cst_50 = arith.constant -3.40282347E+38 : f32
    %162 = vector.shape_cast %11 : vector<1x384xi1> to vector<1x384xi1>
    %163 = vector.broadcast %162 : vector<1x384xi1> to vector<4x384xi1>
    %164 = vector.broadcast %cst_50 : f32 to vector<4x384xf32>
    %165 = arith.select %163, %161, %164 : vector<4x384xi1>, vector<4x384xf32>
    %166 = arith.maximumf %160, %165 : vector<4x384xf32>
    %c2_i32_51 = arith.constant 2 : i32
    %167 = tpu.dynamic_rotate %146 by %c2_i32_51 dim 1 : vector<4x384xf32>, i32 -> vector<4x384xf32>
    %cst_52 = arith.constant -3.40282347E+38 : f32
    %168 = vector.shape_cast %13 : vector<1x384xi1> to vector<1x384xi1>
    %169 = vector.broadcast %168 : vector<1x384xi1> to vector<4x384xi1>
    %170 = vector.broadcast %cst_52 : f32 to vector<4x384xf32>
    %171 = arith.select %169, %167, %170 : vector<4x384xi1>, vector<4x384xf32>
    %172 = arith.maximumf %166, %171 : vector<4x384xf32>
    %c368_i32_53 = arith.constant 368 : i32
    %173 = tpu.dynamic_rotate %172 by %c368_i32_53 dim 1 : vector<4x384xf32>, i32 -> vector<4x384xf32>
    %cst_54 = arith.constant -3.40282347E+38 : f32
    %174 = vector.shape_cast %7 : vector<1x384xi1> to vector<1x384xi1>
    %175 = vector.broadcast %174 : vector<1x384xi1> to vector<4x384xi1>
    %176 = vector.broadcast %cst_54 : f32 to vector<4x384xf32>
    %177 = arith.select %175, %173, %176 : vector<4x384xi1>, vector<4x384xf32>
    %178 = arith.maximumf %172, %177 : vector<4x384xf32>
    %c16_i32_55 = arith.constant 16 : i32
    %179 = tpu.dynamic_rotate %172 by %c16_i32_55 dim 1 : vector<4x384xf32>, i32 -> vector<4x384xf32>
    %cst_56 = arith.constant -3.40282347E+38 : f32
    %180 = vector.shape_cast %9 : vector<1x384xi1> to vector<1x384xi1>
    %181 = vector.broadcast %180 : vector<1x384xi1> to vector<4x384xi1>
    %182 = vector.broadcast %cst_56 : f32 to vector<4x384xf32>
    %183 = arith.select %181, %179, %182 : vector<4x384xi1>, vector<4x384xf32>
    %184 = arith.maximumf %178, %183 : vector<4x384xf32>
    %c352_i32_57 = arith.constant 352 : i32
    %185 = tpu.dynamic_rotate %172 by %c352_i32_57 dim 1 : vector<4x384xf32>, i32 -> vector<4x384xf32>
    %cst_58 = arith.constant -3.40282347E+38 : f32
    %186 = vector.shape_cast %15 : vector<1x384xi1> to vector<1x384xi1>
    %187 = vector.broadcast %186 : vector<1x384xi1> to vector<4x384xi1>
    %188 = vector.broadcast %cst_58 : f32 to vector<4x384xf32>
    %189 = arith.select %187, %185, %188 : vector<4x384xi1>, vector<4x384xf32>
    %190 = arith.maximumf %184, %189 : vector<4x384xf32>
    %c32_i32_59 = arith.constant 32 : i32
    %191 = tpu.dynamic_rotate %172 by %c32_i32_59 dim 1 : vector<4x384xf32>, i32 -> vector<4x384xf32>
    %cst_60 = arith.constant -3.40282347E+38 : f32
    %192 = vector.shape_cast %17 : vector<1x384xi1> to vector<1x384xi1>
    %193 = vector.broadcast %192 : vector<1x384xi1> to vector<4x384xi1>
    %194 = vector.broadcast %cst_60 : f32 to vector<4x384xf32>
    %195 = arith.select %193, %191, %194 : vector<4x384xi1>, vector<4x384xf32>
    %196 = arith.maximumf %190, %195 : vector<4x384xf32>
    %197 = vector.extract_strided_slice %196 {offsets = [0, 128], sizes = [4, 128], strides = [1, 1]} : vector<4x384xf32> to vector<4x128xf32>
    %c12 = arith.constant 12 : index
    %c0_61 = arith.constant 0 : index
    %198 = vector.load %arg10[%c12, %c0_61] : memref<16x128xf32, #tpu.memory_space<vmem>>, vector<4x128xf32>
    tpu.vector_store %arg10[%c12, %c0_61], %197 {strides = array<i32>} : memref<16x128xf32, #tpu.memory_space<vmem>>, vector<4x128xf32>,
    %c0_62 = arith.constant 0 : index
    %c0_63 = arith.constant 0 : index
    %199 = vector.load %arg7[%c0_62, %c0_63] : memref<8x16xf32, #tpu.memory_space<vmem>>, vector<8x16xf32>
    %c0_64 = arith.constant 0 : index
    %c0_65 = arith.constant 0 : index
    %200 = vector.load %arg10[%c0_64, %c0_65] : memref<16x128xf32, #tpu.memory_space<vmem>>, vector<16x128xf32>
    %cst_66 = arith.constant dense<0.000000e+00> : vector<8x128xf32>
    %201 = tpu.matmul %199, %200, %cst_66 {dimension_numbers = #tpu.dot_dimension_numbers<[1], [0], [0], [1], [0, 0, 1, 1], [], []>} : vector<8x16xf32>, vector<16x128xf32>, vector<8x128xf32> -> vector<8x128xf32>
    %c0_67 = arith.constant 0 : index
    %c0_68 = arith.constant 0 : index
    %202 = vector.load %arg8[%c0_67, %c0_68] : memref<8x1xf32, #tpu.memory_space<vmem>>, vector<8x1xf32>
    %203 = vector.broadcast %202 : vector<8x1xf32> to vector<8x128xf32>
    %204 = arith.addf %201, %203 : vector<8x128xf32>
    %cst_69 = arith.constant 0.000000e+00 : f32
    %205 = vector.broadcast %cst_69 : f32 to vector<8x128xf32>
    %206 = arith.subf %205, %204 : vector<8x128xf32>
    %207 = math.exp %206 : vector<8x128xf32>
    %cst_70 = arith.constant 1.000000e+00 : f32
    %208 = vector.broadcast %cst_70 : f32 to vector<8x128xf32>
    %209 = arith.addf %208, %207 : vector<8x128xf32>
    %210 = tpu.reciprocal %209 : vector<8x128xf32> -> vector<8x128xf32>
    %211 = arith.mulf %204, %210 : vector<8x128xf32>
    %c0_71 = arith.constant 0 : index
    %c0_72 = arith.constant 0 : index
    %c0_73 = arith.constant 0 : index
    %212 = vector.load %arg9[%c0_71, %c0_72, %c0_73] : memref<1x8x128xf32, #tpu.memory_space<vmem>>, vector<1x8x128xf32>
    %213 = vector.shape_cast %212 : vector<1x8x128xf32> to vector<8x128xf32>
    %214 = vector.shape_cast %211 : vector<8x128xf32> to vector<1x8x128xf32>
    tpu.vector_store %arg9[%c0_71, %c0_72, %c0_73], %214 {strides = array<i32>} : memref<1x8x128xf32, #tpu.memory_space<vmem>>, vector<1x8x128xf32>,
    return
  }
  func.func @transform_0(%arg0: i32, %arg1: i32) -> (i32, i32) {
    %c0_i32 = arith.constant 0 : i32
    %c0_i32_0 = arith.constant 0 : i32
    %c0_i32_1 = arith.constant 0 : i32
    return %c0_i32, %c0_i32_0 : i32, i32
  }
  func.func @transform_1(%arg0: i32, %arg1: i32) -> (i32, i32) {
    %c0_i32 = arith.constant 0 : i32
    %c0_i32_0 = arith.constant 0 : i32
    %c0_i32_1 = arith.constant 0 : i32
    return %c0_i32, %c0_i32_0 : i32, i32
  }
  func.func @transform_2(%arg0: i32, %arg1: i32) -> (i32, i32, i32) {
    %c0_i32 = arith.constant 0 : i32
    %c0_i32_0 = arith.constant 0 : i32
    %c0_i32_1 = arith.constant 0 : i32
    return %arg0, %c0_i32, %c0_i32_0 : i32, i32, i32
  }
  func.func @transform_3(%arg0: i32, %arg1: i32) -> (i32, i32) {
    %c0_i32 = arith.constant 0 : i32
    %c0_i32_0 = arith.constant 0 : i32
    %c0_i32_1 = arith.constant 0 : i32
    return %c0_i32, %c0_i32_0 : i32, i32
  }
  func.func @transform_4(%arg0: i32, %arg1: i32) -> (i32, i32) {
    %c0_i32 = arith.constant 0 : i32
    %c0_i32_0 = arith.constant 0 : i32
    %c0_i32_1 = arith.constant 0 : i32
    return %c0_i32, %c0_i32_0 : i32, i32
  }
  func.func @transform_5(%arg0: i32, %arg1: i32) -> (i32, i32) {
    %c0_i32 = arith.constant 0 : i32
    %c0_i32_0 = arith.constant 0 : i32
    %c0_i32_1 = arith.constant 0 : i32
    return %c0_i32, %c0_i32_0 : i32, i32
  }
  func.func @transform_6(%arg0: i32, %arg1: i32) -> (i32, i32) {
    %c0_i32 = arith.constant 0 : i32
    %c0_i32_0 = arith.constant 0 : i32
    %c0_i32_1 = arith.constant 0 : i32
    return %c0_i32, %c0_i32_0 : i32, i32
  }
  func.func @transform_7(%arg0: i32, %arg1: i32) -> (i32, i32, i32) {
    %c0_i32 = arith.constant 0 : i32
    %c0_i32_0 = arith.constant 0 : i32
    return %arg0, %c0_i32, %arg1 : i32, i32, i32
  }
}

</mosaic_0001>

<llo_original>
// kernel: tpu_custom_call.1
$region0: #{tpu_custom_call.1}
  #allocation0 [shape = 'u32[]', space=smem, size = 0x4, offset = 0x4, fixed_abs, tag = 'smem constant byte address 0x4 - core index']
  #allocation1 [shape = 'u32[144,128]{1,0:T(1,128)}', space=vmem, size = 0x12000, scoped, tag = 'internal scratch']
  #allocation2 [shape = 'f32[16,128]{1,0:T(8,128)}', space=vmem, size = 0x2000, scoped, tag = 'scratch operand']
  %s0 = inlined_call_operand.vmem [shape: s32[1,384], index: 0, kind: input, shape index: {}]
  %s1 = inlined_call_operand.hbm [shape: s32[1,384], index: 1, kind: input, shape index: {}]
  %s2 = inlined_call_operand.hbm [shape: f32[2,8,512], index: 2, kind: input, shape index: {}]
  %s3 = inlined_call_operand.vmem [shape: f32[4,8], index: 3, kind: input, shape index: {}]
  %s4 = inlined_call_operand.vmem [shape: f32[4,1], index: 4, kind: input, shape index: {}]
  %s5 = inlined_call_operand.vmem [shape: f32[8,16], index: 5, kind: input, shape index: {}]
  %s6 = inlined_call_operand.vmem [shape: f32[8,1], index: 6, kind: input, shape index: {}]
  %s7 = inlined_call_operand.hbm [shape: f32[2,8,256], index: 7, kind: output, shape index: {}]
  %s8 = sld [smem:[#allocation0]]
  $region69: #{tpu_custom_call.1} parent=0
    _
  %s10 = ssub.s32 1, %s8
  %s11 = scalar_select 0, %s10, %s8
  $region1: #{tpu_custom_call.1} parent=0
    #allocation3 [shape = 'u8[1536]{0}', space=vmem, size = 0x800, scoped, tag = 'input window, operand 1, single buffered']
    #allocation4 [shape = 's32[2]{0}', space=sflag, size = 0x8, scoped, tag = 'scoped memory for tpu_custom_call.1']
    #allocation5 [shape = 's32[2]{0}', space=sflag, size = 0x8, scoped, tag = 'scoped memory for tpu_custom_call.1']
    #allocation6 [shape = 'u8[32768]{0}', space=vmem, size = 0x8000, scoped, tag = 'input window, operand 2']
    #allocation7 [shape = 's32[2]{0}', space=sflag, size = 0x8, scoped, tag = 'scoped memory for tpu_custom_call.1']
    #allocation8 [shape = 'u8[8192]{0}', space=vmem, size = 0x2000, scoped, tag = 'output window, operand 0']
    %12 = vsyncpa [#allocation4], 0
    %13 = vsyncpa [#allocation7], 0
    %s14 = scalar_lea.sflag [#allocation7], 1
    %15 = vsyncpa %s14, 0
    %16 = vsyncpa [#allocation5], 0
    %s17 = scalar_lea.sflag [#allocation5], 1
    %18 = vsyncpa %s17, 0
    loop: start=0, step=1, limit=6
    $region2: #{tpu_custom_call.1} parent=1 // loop_pre_header
      _
    $region3: #{tpu_custom_call.1} parent=1 // loop_header
      %s20 = sphi 0, %s24
      %p21 = scmp.ge.s32.totalorder %s20, 6
      %s27 = sphi 0, %s39
      %s28 = sphi 0, %s35
      %s29 = sphi 0, %s27
      %s30 = sphi 0, %s28
      %s31 = sphi 0, %s29
      %s32 = sphi 0, %s30
      %s40 = sphi 0, %s40
      %s42 = sphi 0, %s40
      %s43 = sphi 0, %s42
      %s57 = sphi 0, %s43
      %s61 = sphi 0, %s61
      %s63 = sphi 0, %s61
      %s64 = sphi 0, %s63
      %s78 = sphi 0, %s64
      %s84 = sphi 0, %s86
      %s87 = sphi 0, %s84
      %s88 = sphi 0, %s87
      %s104 = sphi 0, %s88
      %s108 = sphi 0, %s108
      %s110 = sphi 0, %s108
      %s111 = sphi 0, %s110
      %s125 = sphi 0, %s111
      %s129 = sphi 0, %s129
      %s131 = sphi 0, %s129
      %s132 = sphi 0, %s131
      %s146 = sphi 0, %s132
      %s150 = sphi 0, %s150
      %s152 = sphi 0, %s150
      %s153 = sphi 0, %s152
      %s167 = sphi 0, %s153
      %s171 = sphi 0, %s171
      %s173 = sphi 0, %s171
      %s174 = sphi 0, %s173
      %s188 = sphi 0, %s174
      %s196 = sphi 0, %s198
      %s199 = sphi 0, %s196
      %s200 = sphi 0, %s199
      %s216 = sphi 0, %s200
    $region4: #{tpu_custom_call.1} parent=1 // loop_header_branch
      %23 = sbr.rel (%p21) target = $region8
    $region5: #{tpu_custom_call.1} parent=1 // loop_body
      %s25 = ssub.s32 %s20, 1
      %s26 = ssub.s32 %s20, 2
      %s33 = sadd.s32 1, %s28
      %p34 = scmp.ge.s32.totalorder %s33, 2
      %s35 = scalar_select %p34, 0, %s33
      %s36 = sadd.s32 1, %s27
      %s37 = scalar_select %p34, %s36, %s27
      %p38 = scmp.ge.s32.totalorder %s37, 2
      %s39 = scalar_select %p38, 0, %s37
      %s41 = sadd.s32 %s40, 1
      %p44 = scmp.eq.s32.totalorder %s20, 3
      %p45 = scmp.ne.s32.totalorder %s40, %s42
      %p46 = scmp.eq.s32.totalorder %s20, 0
      %p47 = por %p45, %p46
      %p48 = scmp.ne.s32.totalorder %s40, %s42
      %p49 = scmp.eq.s32.totalorder %s25, 3
      %p50 = por %p48, %p49
      %p51 = scmp.ne.s32.totalorder %s42, %s43
      %p52 = scmp.eq.s32.totalorder %s25, 0
      %p53 = por %p51, %p52
      %p54 = scmp.ne.s32.totalorder %s42, %s43
      %p55 = scmp.eq.s32.totalorder %s26, 3
      %p56 = por %p54, %p55
      %p58 = scmp.ne.s32.totalorder %s43, %s57
      %p59 = scmp.eq.s32.totalorder %s26, 0
      %p60 = por %p58, %p59
      %s62 = sadd.s32 %s61, 1
      %p65 = scmp.eq.s32.totalorder %s20, 3
      %p66 = scmp.ne.s32.totalorder %s61, %s63
      %p67 = scmp.eq.s32.totalorder %s20, 0
      %p68 = por %p66, %p67
      %p69 = scmp.ne.s32.totalorder %s61, %s63
      %p70 = scmp.eq.s32.totalorder %s25, 3
      %p71 = por %p69, %p70
      %p72 = scmp.ne.s32.totalorder %s63, %s64
      %p73 = scmp.eq.s32.totalorder %s25, 0
      %p74 = por %p72, %p73
      %p75 = scmp.ne.s32.totalorder %s63, %s64
      %p76 = scmp.eq.s32.totalorder %s26, 3
      %p77 = por %p75, %p76
      %p79 = scmp.ne.s32.totalorder %s64, %s78
      %p80 = scmp.eq.s32.totalorder %s26, 0
      %p81 = por %p79, %p80
      %s82 = ssub.s32 %s27, %s39
      %p83 = scmp.eq.s32.totalorder %s82, 0
      %s85 = sadd.s32 %s84, 1
      %s86 = scalar_select %p83, %s84, %s85
      %p89 = pneg %p83
      %p90 = scmp.eq.s32.totalorder %s20, 3
      %p91 = por %p89, %p90
      %p92 = scmp.ne.s32.totalorder %s84, %s87
      %p93 = scmp.eq.s32.totalorder %s20, 0
      %p94 = por %p92, %p93
      %p95 = scmp.ne.s32.totalorder %s84, %s87
      %p96 = scmp.eq.s32.totalorder %s25, 3
      %p97 = por %p95, %p96
      %p98 = scmp.ne.s32.totalorder %s87, %s88
      %p99 = scmp.eq.s32.totalorder %s25, 0
      %p100 = por %p98, %p99
      %p101 = scmp.ne.s32.totalorder %s87, %s88
      %p102 = scmp.eq.s32.totalorder %s26, 3
      %p103 = por %p101, %p102
      %p105 = scmp.ne.s32.totalorder %s88, %s104
      %p106 = scmp.eq.s32.totalorder %s26, 0
      %p107 = por %p105, %p106
      %s109 = sadd.s32 %s108, 1
      %p112 = scmp.eq.s32.totalorder %s20, 3
      %p113 = scmp.ne.s32.totalorder %s108, %s110
      %p114 = scmp.eq.s32.totalorder %s20, 0
      %p115 = por %p113, %p114
      %p116 = scmp.ne.s32.totalorder %s108, %s110
      %p117 = scmp.eq.s32.totalorder %s25, 3
      %p118 = por %p116, %p117
      %p119 = scmp.ne.s32.totalorder %s110, %s111
      %p120 = scmp.eq.s32.totalorder %s25, 0
      %p121 = por %p119, %p120
      %p122 = scmp.ne.s32.totalorder %s110, %s111
      %p123 = scmp.eq.s32.totalorder %s26, 3
      %p124 = por %p122, %p123
      %p126 = scmp.ne.s32.totalorder %s111, %s125
      %p127 = scmp.eq.s32.totalorder %s26, 0
      %p128 = por %p126, %p127
      %s130 = sadd.s32 %s129, 1
      %p133 = scmp.eq.s32.totalorder %s20, 3
      %p134 = scmp.ne.s32.totalorder %s129, %s131
      %p135 = scmp.eq.s32.totalorder %s20, 0
      %p136 = por %p134, %p135
      %p137 = scmp.ne.s32.totalorder %s129, %s131
      %p138 = scmp.eq.s32.totalorder %s25, 3
      %p139 = por %p137, %p138
      %p140 = scmp.ne.s32.totalorder %s131, %s132
      %p141 = scmp.eq.s32.totalorder %s25, 0
      %p142 = por %p140, %p141
      %p143 = scmp.ne.s32.totalorder %s131, %s132
      %p144 = scmp.eq.s32.totalorder %s26, 3
      %p145 = por %p143, %p144
      %p147 = scmp.ne.s32.totalorder %s132, %s146
      %p148 = scmp.eq.s32.totalorder %s26, 0
      %p149 = por %p147, %p148
      %s151 = sadd.s32 %s150, 1
      %p154 = scmp.eq.s32.totalorder %s20, 3
      %p155 = scmp.ne.s32.totalorder %s150, %s152
      %p156 = scmp.eq.s32.totalorder %s20, 0
      %p157 = por %p155, %p156
      %p158 = scmp.ne.s32.totalorder %s150, %s152
      %p159 = scmp.eq.s32.totalorder %s25, 3
      %p160 = por %p158, %p159
      %p161 = scmp.ne.s32.totalorder %s152, %s153
      %p162 = scmp.eq.s32.totalorder %s25, 0
      %p163 = por %p161, %p162
      %p164 = scmp.ne.s32.totalorder %s152, %s153
      %p165 = scmp.eq.s32.totalorder %s26, 3
      %p166 = por %p164, %p165
      %p168 = scmp.ne.s32.totalorder %s153, %s167
      %p169 = scmp.eq.s32.totalorder %s26, 0
      %p170 = por %p168, %p169
      %s172 = sadd.s32 %s171, 1
      %p175 = scmp.eq.s32.totalorder %s20, 3
      %p176 = scmp.ne.s32.totalorder %s171, %s173
      %p177 = scmp.eq.s32.totalorder %s20, 0
      %p178 = por %p176, %p177
      %p179 = scmp.ne.s32.totalorder %s171, %s173
      %p180 = scmp.eq.s32.totalorder %s25, 3
      %p181 = por %p179, %p180
      %p182 = scmp.ne.s32.totalorder %s173, %s174
      %p183 = scmp.eq.s32.totalorder %s25, 0
      %p184 = por %p182, %p183
      %p185 = scmp.ne.s32.totalorder %s173, %s174
      %p186 = scmp.eq.s32.totalorder %s26, 3
      %p187 = por %p185, %p186
      %p189 = scmp.ne.s32.totalorder %s174, %s188
      %p190 = scmp.eq.s32.totalorder %s26, 0
      %p191 = por %p189, %p190
      %s192 = ssub.s32 %s27, %s39
      %s193 = ssub.s32 %s28, %s35
      %s194 = sor.u32 %s192, %s193
      %p195 = scmp.eq.s32.totalorder %s194, 0
      %s197 = sadd.s32 %s196, 1
      %s198 = scalar_select %p195, %s196, %s197
      %p201 = pneg %p195
      %p202 = scmp.eq.s32.totalorder %s20, 3
      %p203 = por %p201, %p202
      %p204 = scmp.ne.s32.totalorder %s196, %s199
      %p205 = scmp.eq.s32.totalorder %s20, 0
      %p206 = por %p204, %p205
      %p207 = scmp.ne.s32.totalorder %s196, %s199
      %p208 = scmp.eq.s32.totalorder %s25, 3
      %p209 = por %p207, %p208
      %p210 = scmp.ne.s32.totalorder %s199, %s200
      %p211 = scmp.eq.s32.totalorder %s25, 0
      %p212 = por %p210, %p211
      %p213 = scmp.ne.s32.totalorder %s199, %s200
      %p214 = scmp.eq.s32.totalorder %s26, 3
      %p215 = por %p213, %p214
      %p217 = scmp.ne.s32.totalorder %s200, %s216
      %p218 = scmp.eq.s32.totalorder %s26, 0
      %p219 = por %p217, %p218
      %p220 = scmp.le.s32.totalorder 1, %s20
      %p221 = scmp.lt.s32.totalorder %s20, 5
      %p222 = pnand %p220, %p221
      %p223 = pneg %p222
      // Predicated region
      $region9: #{tpu_custom_call.1} parent=5 // pred_check
        _
      $region10: #{tpu_custom_call.1} parent=5 // pred_check_branch
        %225 = sbr.rel (%p222) target = $region12
      $region11: #{tpu_custom_call.1} parent=5 // pred_region
        %s226 = ssub.s32 %s20, 1
        // Predicated region
        $region13: #{tpu_custom_call.1} parent=11 // pred_check
          %p227 = pneg %p53
        $region14: #{tpu_custom_call.1} parent=11 // pred_check_branch
          %229 = sbr.rel (%p227) target = $region16
        $region15: #{tpu_custom_call.1} parent=11 // pred_region
          _
        $region16: #{tpu_custom_call.1} parent=11 // pred_fallthru
          _
        // Predicated region
        $region17: #{tpu_custom_call.1} parent=11 // pred_check
          %p230 = pneg %p74
        $region18: #{tpu_custom_call.1} parent=11 // pred_check_branch
          %232 = sbr.rel (%p230) target = $region20
        $region19: #{tpu_custom_call.1} parent=11 // pred_region
          %s234 = ssub.s32 48, 48
          %235 = vsyncadd [#allocation4], %s234
          %s237 = sshll.u32 [#allocation3], 4
          %s238 = int_to_ptr.vmem [resolvable:$true] %s237
          %240 = dma.hbm_to_vmem [thread:$0]  %s1, 48, %s238, [#allocation4]
        $region20: #{tpu_custom_call.1} parent=11 // pred_fallthru
          _
        // Predicated region
        $region21: #{tpu_custom_call.1} parent=11 // pred_check
          %p241 = pneg %p121
        $region22: #{tpu_custom_call.1} parent=11 // pred_check_branch
          %243 = sbr.rel (%p241) target = $region24
        $region23: #{tpu_custom_call.1} parent=11 // pred_region
          _
        $region24: #{tpu_custom_call.1} parent=11 // pred_fallthru
          _
        // Predicated region
        $region25: #{tpu_custom_call.1} parent=11 // pred_check
          %p244 = pneg %p142
        $region26: #{tpu_custom_call.1} parent=11 // pred_check_branch
          %246 = sbr.rel (%p244) target = $region28
        $region27: #{tpu_custom_call.1} parent=11 // pred_region
          _
        $region28: #{tpu_custom_call.1} parent=11 // pred_fallthru
          _
        // Predicated region
        $region29: #{tpu_custom_call.1} parent=11 // pred_check
          %p247 = pneg %p163
        $region30: #{tpu_custom_call.1} parent=11 // pred_check_branch
          %249 = sbr.rel (%p247) target = $region32
        $region31: #{tpu_custom_call.1} parent=11 // pred_region
          _
        $region32: #{tpu_custom_call.1} parent=11 // pred_fallthru
          _
        // Predicated region
        $region33: #{tpu_custom_call.1} parent=11 // pred_check
          %p250 = pneg %p184
        $region34: #{tpu_custom_call.1} parent=11 // pred_check_branch
          %252 = sbr.rel (%p250) target = $region36
        $region35: #{tpu_custom_call.1} parent=11 // pred_region
          _
        $region36: #{tpu_custom_call.1} parent=11 // pred_fallthru
          _
      $region12: #{tpu_custom_call.1} parent=5 // pred_fallthru
        _
      %p253 = scmp.lt.s32.totalorder %s20, 4
      // Predicated region
      $region37: #{tpu_custom_call.1} parent=5 // pred_check
        %p254 = pneg %p253
      $region38: #{tpu_custom_call.1} parent=5 // pred_check_branch
        %256 = sbr.rel (%p254) target = $region40
      $region39: #{tpu_custom_call.1} parent=5 // pred_region
        // Predicated region
        $region41: #{tpu_custom_call.1} parent=39 // pred_check
          %p257 = pneg %p94
        $region42: #{tpu_custom_call.1} parent=39 // pred_check_branch
          %259 = sbr.rel (%p257) target = $region44
        $region43: #{tpu_custom_call.1} parent=39 // pred_region
          %s260 = sand.u32 %s84, 1
          %s261 = scalar_lea.sflag [#allocation7], %s260
          %s262 = sand.u32 %s84, 1
          %s263 = smul.addr %s262, 32
          %s264 = scalar_lea.vmem [#allocation6], %s263
          %s266 = ssub.s32 512, 512
          %267 = vsyncadd %s261, %s266
          %s268 = smul.addr %s27, 4
          %s269 = smul.addr %s268, 128
          %s270 = scalar_lea.hbm %s2, %s269
          %s272 = sshll.u32 %s264, 4
          %s273 = int_to_ptr.vmem [resolvable:$true] %s272
          %275 = dma.hbm_to_vmem [thread:$0]  %s270, 512, %s273, %s261
        $region44: #{tpu_custom_call.1} parent=39 // pred_fallthru
          _
      $region40: #{tpu_custom_call.1} parent=5 // pred_fallthru
        _
      %p276 = scmp.le.s32.totalorder 1, %s20
      %p277 = scmp.lt.s32.totalorder %s20, 5
      %p278 = pnand %p276, %p277
      %p279 = pneg %p278
      // Predicated region
      $region45: #{tpu_custom_call.1} parent=5 // pred_check
        _
      $region46: #{tpu_custom_call.1} parent=5 // pred_check_branch
        %281 = sbr.rel (%p278) target = $region48
      $region47: #{tpu_custom_call.1} parent=5 // pred_region
        %s282 = ssub.s32 %s20, 1
        // Predicated region
        $region49: #{tpu_custom_call.1} parent=47 // pred_check
          %p283 = pneg %p74
        $region50: #{tpu_custom_call.1} parent=47 // pred_check_branch
          %285 = sbr.rel (%p283) target = $region52
        $region51: #{tpu_custom_call.1} parent=47 // pred_region
          %286 = dma.done [#allocation4], 48
        $region52: #{tpu_custom_call.1} parent=47 // pred_fallthru
          _
        %s287 = sand.u32 %s87, 1
        %s288 = scalar_lea.sflag [#allocation7], %s287
        %s289 = sand.u32 %s87, 1
        %s290 = smul.addr %s289, 32
        %s291 = scalar_lea.vmem [#allocation6], %s290
        // Predicated region
        $region53: #{tpu_custom_call.1} parent=47 // pred_check
          %p292 = pneg %p100
        $region54: #{tpu_custom_call.1} parent=47 // pred_check_branch
          %294 = sbr.rel (%p292) target = $region56
        $region55: #{tpu_custom_call.1} parent=47 // pred_region
          %295 = dma.done %s288, 512
        $region56: #{tpu_custom_call.1} parent=47 // pred_fallthru
          _
        %p296 = pneg %p53
        %p297 = pneg %p50
        %p298 = pneg %p74
        %p299 = pneg %p71
        %s300 = sand.u32 %s87, 1
        %s301 = scalar_lea.sflag [#allocation7], %s300
        %s302 = sand.u32 %s87, 1
        %s303 = smul.addr %s302, 32
        %s304 = scalar_lea.vmem [#allocation6], %s303
        %p305 = pneg %p100
        %p306 = pneg %p97
        %p307 = pneg %p121
        %p308 = pneg %p118
        %p309 = pneg %p142
        %p310 = pneg %p139
        %p311 = pneg %p163
        %p312 = pneg %p160
        %p313 = pneg %p184
        %p314 = pneg %p181
        %p315 = pneg %p212
        %p316 = pneg %p209
        %s317 = sand.u32 %s199, 1
        %s318 = scalar_lea.sflag [#allocation5], %s317
        %s319 = sand.u32 %s199, 1
        %s320 = smul.addr %s319, 8
        %s321 = scalar_lea.vmem [#allocation8], %s320
        %v322 = vld [vmem:[%s0] sm:$0x7]
        %v323 = vld [vmem:[#allocation3] sm:$0x7]
        %vm324 = vcmp.lt.s32.totalorder %v322, 15
        %vm325 = vcmp.ge.s32.totalorder %v322, 1
        %vm326 = vcmp.lt.s32.totalorder %v323, 23
        %vm327 = vcmp.ge.s32.totalorder %v323, 1
        %vm328 = vcmp.lt.s32.totalorder %v322, 14
        %vm329 = vcmp.ge.s32.totalorder %v322, 2
        %vm330 = vcmp.lt.s32.totalorder %v323, 22
        %vm331 = vcmp.ge.s32.totalorder %v323, 2
        %s332 = smul.u32 %s30, 8
        %v333 = vstv %s332
        %v334 = vadd.s32 %v323, %v333
        %vm335 = vcmp.ge.s32.totalorder %v334, 8
        %vm336 = vcmp.lt.s32.totalorder %v334, 24
        %vm337 = vmand %vm335, %vm336
        %s338 = smul.u32 %s30, 128
        %s339 = sshra.s32 %s338, 7
        %s340 = sand.u32 %s338, 127
        %s341 = smul.addr %s339, 8
        %s342 = scalar_lea.vmem %s291, %s341 [#allocation6]
        %v343 = vld [vmem:[%s342] sm:$0xff]
        %v344 = vld [vmem:[%s342 + $0x8] sm:$0xff]
        %v345 = vld [vmem:[%s342 + $0x10] sm:$0xff]
        %v346 = vld [vmem:[%s3] sm:$0xf]
        %v347 = vld [vmem:[%s4] sm:$0xf]
        %349 = vset.pattern.permute.xlu0 0
        %350 = vperm.xlu0 %349, %v347
        %v351 = vpop.permute.xlu0 %350
        %vm353 = vcmask 64512
        %v355 = vsel %vm353, %v346, 0
        %357 = vmatprep.subr.mxu0 %v344
        %358 = vmatpush1.msra.mxu0 %v343
        %359 = vmatprep.subr.mxu0 0.0
        %360 = vmatpush1.msra.mxu0 0.0
        %361 = vmatprep.subr.mxu0 0.0
        %362 = vmatpush1.msra.mxu0 0.0
        %363 = vmatprep.subr.mxu0 0.0
        %364 = vmatpush1.msra.mxu0 0.0
        %365 = vmatprep.subr.mxu0 0.0
        %366 = vmatpush1.msra.mxu0 0.0
        %367 = vmatprep.subr.mxu0 0.0
        %368 = vmatpush1.msra.mxu0 0.0
        %369 = vmatprep.subr.mxu0 0.0
        %370 = vmatpush1.msra.mxu0 0.0
        %371 = vmatprep.subr.mxu0 0.0
        %372 = vmatpush1.msra.mxu0 0.0
        %373 = vmatprep.subr.mxu0 0.0
        %374 = vmatpush1.msra.mxu0 0.0
        %375 = vmatprep.subr.mxu0 0.0
        %376 = vmatpush1.msra.mxu0 0.0
        %377 = vmatprep.subr.mxu0 0.0
        %378 = vmatpush1.msra.mxu0 0.0
        %379 = vmatprep.subr.mxu0 0.0
        %380 = vmatpush1.msra.mxu0 0.0
        %381 = vmatprep.subr.mxu0 0.0
        %382 = vmatpush1.msra.mxu0 0.0
        %383 = vmatprep.subr.mxu0 0.0
        %384 = vmatpush1.msra.mxu0 0.0
        %385 = vmatprep.subr.mxu0 0.0
        %386 = vmatpush1.msra.mxu0 0.0
        %387 = vmatprep.subr.mxu0 0.0
        %388 = vmatpush1.msra.mxu0 0.0
        %389 = vmatprep.subr.mxu0 0.0
        %390 = vmatpush1.msra.mxu0 0.0
        %391 = vmatprep.subr.mxu0 0.0
        %392 = vmatpush1.msra.mxu0 0.0
        %393 = vmatprep.subr.mxu0 0.0
        %394 = vmatpush1.msra.mxu0 0.0
        %395 = vmatprep.subr.mxu0 0.0
        %396 = vmatpush1.msra.mxu0 0.0
        %397 = vmatprep.subr.mxu0 0.0
        %398 = vmatpush1.msra.mxu0 0.0
        %399 = vmatprep.subr.mxu0 0.0
        %400 = vmatpush1.msra.mxu0 0.0
        %401 = vmatprep.subr.mxu0 0.0
        %402 = vmatpush1.msra.mxu0 0.0
        %403 = vmatprep.subr.mxu0 0.0
        %404 = vmatpush1.msra.mxu0 0.0
        %405 = vmatprep.subr.mxu0 0.0
        %406 = vmatpush1.msra.mxu0 0.0
        %407 = vmatprep.subr.mxu0 0.0
        %408 = vmatpush1.msra.mxu0 0.0
        %409 = vmatprep.subr.mxu0 0.0
        %410 = vmatpush1.msra.mxu0 0.0
        %411 = vmatprep.subr.mxu0 0.0
        %412 = vmatpush1.msra.mxu0 0.0
        %413 = vmatprep.subr.mxu0 0.0
        %414 = vmatpush1.msra.mxu0 0.0
        %415 = vmatprep.subr.mxu0 0.0
        %416 = vmatpush1.msra.mxu0 0.0
        %417 = vmatprep.subr.mxu0 0.0
        %418 = vmatpush1.msra.mxu0 0.0
        %419 = vmatprep.subr.mxu0 0.0
        %420 = vmatpush1.msra.mxu0 0.0
        %421 = vmatprep.mubr.f32.mxu0 0.0
        %422 = vmatmul.mubr.f32.gmra.mrb[0].mxu0 %v355
        %v423 = vpop.f32.mrb[0].mxu0
        %v424 = vadd.f32 %v351, %v423
        %v425 = vpop.f32.mrb[0].mxu0
        %v426 = vadd.f32 %v351, %v425
        %427 = vdwg.mxu0
        %428 = vmatprep.subr.mxu0 0.0
        %429 = vmatpush1.msra.mxu0 %v345
        %430 = vmatprep.subr.mxu0 0.0
        %431 = vmatpush1.msra.mxu0 0.0
        %432 = vmatprep.subr.mxu0 0.0
        %433 = vmatpush1.msra.mxu0 0.0
        %434 = vmatprep.subr.mxu0 0.0
        %435 = vmatpush1.msra.mxu0 0.0
        %436 = vmatprep.subr.mxu0 0.0
        %437 = vmatpush1.msra.mxu0 0.0
        %438 = vmatprep.subr.mxu0 0.0
        %439 = vmatpush1.msra.mxu0 0.0
        %440 = vmatprep.subr.mxu0 0.0
        %441 = vmatpush1.msra.mxu0 0.0
        %442 = vmatprep.subr.mxu0 0.0
        %443 = vmatpush1.msra.mxu0 0.0
        %444 = vmatprep.subr.mxu0 0.0
        %445 = vmatpush1.msra.mxu0 0.0
        %446 = vmatprep.subr.mxu0 0.0
        %447 = vmatpush1.msra.mxu0 0.0
        %448 = vmatprep.subr.mxu0 0.0
        %449 = vmatpush1.msra.mxu0 0.0
        %450 = vmatprep.subr.mxu0 0.0
        %451 = vmatpush1.msra.mxu0 0.0
        %452 = vmatprep.subr.mxu0 0.0
        %453 = vmatpush1.msra.mxu0 0.0
        %454 = vmatprep.subr.mxu0 0.0
        %455 = vmatpush1.msra.mxu0 0.0
        %456 = vmatprep.subr.mxu0 0.0
        %457 = vmatpush1.msra.mxu0 0.0
        %458 = vmatprep.subr.mxu0 0.0
        %459 = vmatpush1.msra.mxu0 0.0
        %460 = vmatprep.subr.mxu0 0.0
        %461 = vmatpush1.msra.mxu0 0.0
        %462 = vmatprep.subr.mxu0 0.0
        %463 = vmatpush1.msra.mxu0 0.0
        %464 = vmatprep.subr.mxu0 0.0
        %465 = vmatpush1.msra.mxu0 0.0
        %466 = vmatprep.subr.mxu0 0.0
        %467 = vmatpush1.msra.mxu0 0.0
        %468 = vmatprep.subr.mxu0 0.0
        %469 = vmatpush1.msra.mxu0 0.0
        %470 = vmatprep.subr.mxu0 0.0
        %471 = vmatpush1.msra.mxu0 0.0
        %472 = vmatprep.subr.mxu0 0.0
        %473 = vmatpush1.msra.mxu0 0.0
        %474 = vmatprep.subr.mxu0 0.0
        %475 = vmatpush1.msra.mxu0 0.0
        %476 = vmatprep.subr.mxu0 0.0
        %477 = vmatpush1.msra.mxu0 0.0
        %478 = vmatprep.subr.mxu0 0.0
        %479 = vmatpush1.msra.mxu0 0.0
        %480 = vmatprep.subr.mxu0 0.0
        %481 = vmatpush1.msra.mxu0 0.0
        %482 = vmatprep.subr.mxu0 0.0
        %483 = vmatpush1.msra.mxu0 0.0
        %484 = vmatprep.subr.mxu0 0.0
        %485 = vmatpush1.msra.mxu0 0.0
        %486 = vmatprep.subr.mxu0 0.0
        %487 = vmatpush1.msra.mxu0 0.0
        %488 = vmatprep.subr.mxu0 0.0
        %489 = vmatpush1.msra.mxu0 0.0
        %490 = vmatprep.subr.mxu0 0.0
        %491 = vmatpush1.msra.mxu0 0.0
        %492 = vmatprep.mubr.f32.mxu0 0.0
        %493 = vmatmul.mubr.f32.gmra.mrb[0].mxu0 %v355
        %v494 = vpop.f32.mrb[0].mxu0
        %v495 = vadd.f32 %v351, %v494
        %v496 = vpop.f32.mrb[0].mxu0
        %497 = vdwg.mxu0
        %v498 = vsub.f32 0.0, %v424
        %v499 = vsub.f32 0.0, %v426
        %v500 = vsub.f32 0.0, %v495
        %v501 = vmul.f32 %v498, 1.442695
        %v502 = vpow.pop %v501
        %v503 = vmul.f32 %v499, 1.442695
        %v504 = vpow.pop %v503
        %v505 = vmul.f32 %v500, 1.442695
        %v506 = vpow.pop %v505
        %v507 = vadd.f32 %v502, 1.0
        %v508 = vadd.f32 %v504, 1.0
        %v509 = vadd.f32 %v506, 1.0
        %v510 = vrcp.pop %v507
        %v511 = vrcp.pop %v508
        %v512 = vrcp.pop %v509
        %v513 = vmul.f32 %v424, %v510
        %v514 = vmul.f32 %v426, %v511
        %v515 = vmul.f32 %v495, %v512
        %v516 = vsel %vm337, 1, 0
        %v517 = vlaneseq
        %v518 = vshrl.u32 %v517, 7
        %v519 = vsub.s32 0, %v518
        %v520 = vrot.slane %v516, %v519
        %v521 = vlaneseq
        %v522 = vshrl.u32 %v521, 7
        %v523 = vsub.s32 1, %v522
        %v524 = vrot.slane %v516, %v523
        %v525 = vlaneseq
        %v526 = vshrl.u32 %v525, 7
        %v527 = vsub.s32 2, %v526
        %v528 = vrot.slane %v516, %v527
        %vm529 = vcmp.eq.s32.totalorder %v520, 1
        %vm530 = vcmp.eq.s32.totalorder %v524, 1
        %vm531 = vcmp.eq.s32.totalorder %v528, 1
        %v532 = vsel %vm529, %v513, -3.4028235e+38
        %v533 = vsel %vm530, %v514, -3.4028235e+38
        %v534 = vsel %vm531, %v515, -3.4028235e+38
        %535 = vst [vmem:[#allocation2] sm:$0xf] %v533
        %536 = vrot.lane.b32.xlu0 %v532, 127
        %v537 = vpop.permute.xlu0 %536
        %538 = vrot.lane.b32.xlu0 %v533, 127
        %v539 = vpop.permute.xlu0 %538
        %540 = vrot.lane.b32.xlu0 %v534, 127
        %v541 = vpop.permute.xlu0 %540
        %v542 = vlaneseq
        %v543 = vand.u32 %v542, 127
        %vm544 = vcmp.lt.s32.totalorder %v543, 127
        %v545 = vsel %vm544, %v539, %v541
        %v546 = vsel %vm544, %v537, %v539
        %v547 = vsel %vm544, %v541, %v537
        %v548 = vsel %vm324, 1, 0
        %v549 = vlaneseq
        %v550 = vshrl.u32 %v549, 7
        %v551 = vsub.s32 0, %v550
        %v552 = vrot.slane %v548, %v551
        %v553 = vlaneseq
        %v554 = vshrl.u32 %v553, 7
        %v555 = vsub.s32 1, %v554
        %v556 = vrot.slane %v548, %v555
        %v557 = vlaneseq
        %v558 = vshrl.u32 %v557, 7
        %v559 = vsub.s32 2, %v558
        %v560 = vrot.slane %v548, %v559
        %vm561 = vcmp.eq.s32.totalorder %v552, 1
        %vm562 = vcmp.eq.s32.totalorder %v556, 1
        %vm563 = vcmp.eq.s32.totalorder %v560, 1
        %v564 = vsel %vm561, %v546, -3.4028235e+38
        %v565 = vsel %vm562, %v545, -3.4028235e+38
        %v566 = vsel %vm563, %v547, -3.4028235e+38
        %v567 = vmax.f32 %v532, %v564
        %v568 = vmax.f32 %v533, %v565
        %v569 = vmax.f32 %v534, %v566
        %570 = vrot.lane.b32.xlu0 %v532, 1
        %v571 = vpop.permute.xlu0 %570
        %572 = vrot.lane.b32.xlu0 %v533, 1
        %v573 = vpop.permute.xlu0 %572
        %574 = vrot.lane.b32.xlu0 %v534, 1
        %v575 = vpop.permute.xlu0 %574
        %vm576 = vcmp.lt.s32.totalorder %v543, 1
        %v577 = vsel %vm576, %v573, %v575
        %v578 = vsel %vm576, %v571, %v573
        %v579 = vsel %vm576, %v575, %v571
        %v580 = vsel %vm325, 1, 0
        %v581 = vlaneseq
        %v582 = vshrl.u32 %v581, 7
        %v583 = vsub.s32 0, %v582
        %v584 = vrot.slane %v580, %v583
        %v585 = vlaneseq
        %v586 = vshrl.u32 %v585, 7
        %v587 = vsub.s32 1, %v586
        %v588 = vrot.slane %v580, %v587
        %v589 = vlaneseq
        %v590 = vshrl.u32 %v589, 7
        %v591 = vsub.s32 2, %v590
        %v592 = vrot.slane %v580, %v591
        %vm593 = vcmp.eq.s32.totalorder %v584, 1
        %vm594 = vcmp.eq.s32.totalorder %v588, 1
        %vm595 = vcmp.eq.s32.totalorder %v592, 1
        %v596 = vsel %vm593, %v579, -3.4028235e+38
        %v597 = vsel %vm594, %v578, -3.4028235e+38
        %v598 = vsel %vm595, %v577, -3.4028235e+38
        %v599 = vmax.f32 %v567, %v596
        %v600 = vmax.f32 %v568, %v597
        %v601 = vmax.f32 %v569, %v598
        %602 = vrot.lane.b32.xlu0 %v532, 126
        %v603 = vpop.permute.xlu0 %602
        %604 = vrot.lane.b32.xlu0 %v533, 126
        %v605 = vpop.permute.xlu0 %604
        %606 = vrot.lane.b32.xlu0 %v534, 126
        %v607 = vpop.permute.xlu0 %606
        %vm608 = vcmp.lt.s32.totalorder %v543, 126
        %v609 = vsel %vm608, %v605, %v607
        %v610 = vsel %vm608, %v603, %v605
        %v611 = vsel %vm608, %v607, %v603
        %v612 = vsel %vm328, 1, 0
        %v613 = vlaneseq
        %v614 = vshrl.u32 %v613, 7
        %v615 = vsub.s32 0, %v614
        %v616 = vrot.slane %v612, %v615
        %v617 = vlaneseq
        %v618 = vshrl.u32 %v617, 7
        %v619 = vsub.s32 1, %v618
        %v620 = vrot.slane %v612, %v619
        %v621 = vlaneseq
        %v622 = vshrl.u32 %v621, 7
        %v623 = vsub.s32 2, %v622
        %v624 = vrot.slane %v612, %v623
        %vm625 = vcmp.eq.s32.totalorder %v616, 1
        %vm626 = vcmp.eq.s32.totalorder %v620, 1
        %vm627 = vcmp.eq.s32.totalorder %v624, 1
        %v628 = vsel %vm625, %v610, -3.4028235e+38
        %v629 = vsel %vm626, %v609, -3.4028235e+38
        %v630 = vsel %vm627, %v611, -3.4028235e+38
        %v631 = vmax.f32 %v599, %v628
        %v632 = vmax.f32 %v600, %v629
        %v633 = vmax.f32 %v601, %v630
        %634 = vrot.lane.b32.xlu0 %v532, 2
        %v635 = vpop.permute.xlu0 %634
        %636 = vrot.lane.b32.xlu0 %v533, 2
        %v637 = vpop.permute.xlu0 %636
        %638 = vrot.lane.b32.xlu0 %v534, 2
        %v639 = vpop.permute.xlu0 %638
        %vm640 = vcmp.lt.s32.totalorder %v543, 2
        %v641 = vsel %vm640, %v637, %v639
        %v642 = vsel %vm640, %v635, %v637
        %v643 = vsel %vm640, %v639, %v635
        %v644 = vsel %vm329, 1, 0
        %v645 = vlaneseq
        %v646 = vshrl.u32 %v645, 7
        %v647 = vsub.s32 0, %v646
        %v648 = vrot.slane %v644, %v647
        %v649 = vlaneseq
        %v650 = vshrl.u32 %v649, 7
        %v651 = vsub.s32 1, %v650
        %v652 = vrot.slane %v644, %v651
        %v653 = vlaneseq
        %v654 = vshrl.u32 %v653, 7
        %v655 = vsub.s32 2, %v654
        %v656 = vrot.slane %v644, %v655
        %vm657 = vcmp.eq.s32.totalorder %v648, 1
        %vm658 = vcmp.eq.s32.totalorder %v652, 1
        %vm659 = vcmp.eq.s32.totalorder %v656, 1
        %v660 = vsel %vm657, %v643, -3.4028235e+38
        %v661 = vsel %vm658, %v642, -3.4028235e+38
        %v662 = vsel %vm659, %v641, -3.4028235e+38
        %v663 = vmax.f32 %v631, %v660
        %v664 = vmax.f32 %v632, %v661
        %v665 = vmax.f32 %v633, %v662
        %666 = vrot.lane.b32.xlu0 %v663, 112
        %v667 = vpop.permute.xlu0 %666
        %668 = vrot.lane.b32.xlu0 %v664, 112
        %v669 = vpop.permute.xlu0 %668
        %670 = vrot.lane.b32.xlu0 %v665, 112
        %v671 = vpop.permute.xlu0 %670
        %vm672 = vcmp.lt.s32.totalorder %v543, 112
        %v673 = vsel %vm672, %v669, %v671
        %v674 = vsel %vm672, %v667, %v669
        %v675 = vsel %vm672, %v671, %v667
        %v676 = vsel %vm326, 1, 0
        %v677 = vlaneseq
        %v678 = vshrl.u32 %v677, 7
        %v679 = vsub.s32 0, %v678
        %v680 = vrot.slane %v676, %v679
        %v681 = vlaneseq
        %v682 = vshrl.u32 %v681, 7
        %v683 = vsub.s32 1, %v682
        %v684 = vrot.slane %v676, %v683
        %v685 = vlaneseq
        %v686 = vshrl.u32 %v685, 7
        %v687 = vsub.s32 2, %v686
        %v688 = vrot.slane %v676, %v687
        %vm689 = vcmp.eq.s32.totalorder %v680, 1
        %vm690 = vcmp.eq.s32.totalorder %v684, 1
        %vm691 = vcmp.eq.s32.totalorder %v688, 1
        %v692 = vsel %vm689, %v674, -3.4028235e+38
        %v693 = vsel %vm690, %v673, -3.4028235e+38
        %v694 = vsel %vm691, %v675, -3.4028235e+38
        %v695 = vmax.f32 %v663, %v692
        %v696 = vmax.f32 %v664, %v693
        %v697 = vmax.f32 %v665, %v694
        %698 = vrot.lane.b32.xlu0 %v663, 16
        %v699 = vpop.permute.xlu0 %698
        %700 = vrot.lane.b32.xlu0 %v664, 16
        %v701 = vpop.permute.xlu0 %700
        %702 = vrot.lane.b32.xlu0 %v665, 16
        %v703 = vpop.permute.xlu0 %702
        %vm704 = vcmp.lt.s32.totalorder %v543, 16
        %v705 = vsel %vm704, %v701, %v703
        %v706 = vsel %vm704, %v699, %v701
        %v707 = vsel %vm704, %v703, %v699
        %v708 = vsel %vm327, 1, 0
        %v709 = vlaneseq
        %v710 = vshrl.u32 %v709, 7
        %v711 = vsub.s32 0, %v710
        %v712 = vrot.slane %v708, %v711
        %v713 = vlaneseq
        %v714 = vshrl.u32 %v713, 7
        %v715 = vsub.s32 1, %v714
        %v716 = vrot.slane %v708, %v715
        %v717 = vlaneseq
        %v718 = vshrl.u32 %v717, 7
        %v719 = vsub.s32 2, %v718
        %v720 = vrot.slane %v708, %v719
        %vm721 = vcmp.eq.s32.totalorder %v712, 1
        %vm722 = vcmp.eq.s32.totalorder %v716, 1
        %vm723 = vcmp.eq.s32.totalorder %v720, 1
        %v724 = vsel %vm721, %v707, -3.4028235e+38
        %v725 = vsel %vm722, %v706, -3.4028235e+38
        %v726 = vsel %vm723, %v705, -3.4028235e+38
        %v727 = vmax.f32 %v695, %v724
        %v728 = vmax.f32 %v696, %v725
        %v729 = vmax.f32 %v697, %v726
        %730 = vrot.lane.b32.xlu0 %v663, 96
        %v731 = vpop.permute.xlu0 %730
        %732 = vrot.lane.b32.xlu0 %v664, 96
        %v733 = vpop.permute.xlu0 %732
        %734 = vrot.lane.b32.xlu0 %v665, 96
        %v735 = vpop.permute.xlu0 %734
        %vm736 = vcmp.lt.s32.totalorder %v543, 96
        %v737 = vsel %vm736, %v733, %v735
        %v738 = vsel %vm736, %v731, %v733
        %v739 = vsel %vm736, %v735, %v731
        %v740 = vsel %vm330, 1, 0
        %v741 = vlaneseq
        %v742 = vshrl.u32 %v741, 7
        %v743 = vsub.s32 0, %v742
        %v744 = vrot.slane %v740, %v743
        %v745 = vlaneseq
        %v746 = vshrl.u32 %v745, 7
        %v747 = vsub.s32 1, %v746
        %v748 = vrot.slane %v740, %v747
        %v749 = vlaneseq
        %v750 = vshrl.u32 %v749, 7
        %v751 = vsub.s32 2, %v750
        %v752 = vrot.slane %v740, %v751
        %vm753 = vcmp.eq.s32.totalorder %v744, 1
        %vm754 = vcmp.eq.s32.totalorder %v748, 1
        %vm755 = vcmp.eq.s32.totalorder %v752, 1
        %v756 = vsel %vm753, %v738, -3.4028235e+38
        %v757 = vsel %vm754, %v737, -3.4028235e+38
        %v758 = vsel %vm755, %v739, -3.4028235e+38
        %v759 = vmax.f32 %v727, %v756
        %v760 = vmax.f32 %v728, %v757
        %v761 = vmax.f32 %v729, %v758
        %762 = vrot.lane.b32.xlu0 %v663, 32
        %v763 = vpop.permute.xlu0 %762
        %764 = vrot.lane.b32.xlu0 %v664, 32
        %v765 = vpop.permute.xlu0 %764
        %766 = vrot.lane.b32.xlu0 %v665, 32
        %v767 = vpop.permute.xlu0 %766
        %vm768 = vcmp.lt.s32.totalorder %v543, 32
        %v769 = vsel %vm768, %v765, %v767
        %v770 = vsel %vm768, %v763, %v765
        %v771 = vsel %vm768, %v767, %v763
        %v772 = vsel %vm331, 1, 0
        %v773 = vlaneseq
        %v774 = vshrl.u32 %v773, 7
        %v775 = vsub.s32 0, %v774
        %v776 = vrot.slane %v772, %v775
        %v777 = vlaneseq
        %v778 = vshrl.u32 %v777, 7
        %v779 = vsub.s32 1, %v778
        %v780 = vrot.slane %v772, %v779
        %v781 = vlaneseq
        %v782 = vshrl.u32 %v781, 7
        %v783 = vsub.s32 2, %v782
        %v784 = vrot.slane %v772, %v783
        %vm785 = vcmp.eq.s32.totalorder %v776, 1
        %vm786 = vcmp.eq.s32.totalorder %v780, 1
        %vm787 = vcmp.eq.s32.totalorder %v784, 1
        %v788 = vsel %vm785, %v771, -3.4028235e+38
        %v789 = vsel %vm786, %v770, -3.4028235e+38
        %v790 = vsel %vm787, %v769, -3.4028235e+38
        %v791 = vmax.f32 %v759, %v788
        %v792 = vmax.f32 %v760, %v789
        %v793 = vmax.f32 %v761, %v790
        %794 = vst [vmem:[#allocation2 + $0x4] sm:$0xf] %v792
        %795 = vrot.lane.b32.xlu0 %v791, 127
        %v796 = vpop.permute.xlu0 %795
        %797 = vrot.lane.b32.xlu0 %v792, 127
        %v798 = vpop.permute.xlu0 %797
        %799 = vrot.lane.b32.xlu0 %v793, 127
        %v800 = vpop.permute.xlu0 %799
        %v801 = vsel %vm544, %v798, %v800
        %v802 = vsel %vm544, %v796, %v798
        %v803 = vsel %vm544, %v800, %v796
        %v804 = vsel %vm561, %v802, -3.4028235e+38
        %v805 = vsel %vm562, %v801, -3.4028235e+38
        %v806 = vsel %vm563, %v803, -3.4028235e+38
        %v807 = vmax.f32 %v791, %v804
        %v808 = vmax.f32 %v792, %v805
        %v809 = vmax.f32 %v793, %v806
        %810 = vrot.lane.b32.xlu0 %v791, 1
        %v811 = vpop.permute.xlu0 %810
        %812 = vrot.lane.b32.xlu0 %v792, 1
        %v813 = vpop.permute.xlu0 %812
        %814 = vrot.lane.b32.xlu0 %v793, 1
        %v815 = vpop.permute.xlu0 %814
        %v816 = vsel %vm576, %v813, %v815
        %v817 = vsel %vm576, %v811, %v813
        %v818 = vsel %vm576, %v815, %v811
        %v819 = vsel %vm593, %v818, -3.4028235e+38
        %v820 = vsel %vm594, %v817, -3.4028235e+38
        %v821 = vsel %vm595, %v816, -3.4028235e+38
        %v822 = vmax.f32 %v807, %v819
        %v823 = vmax.f32 %v808, %v820
        %v824 = vmax.f32 %v809, %v821
        %825 = vrot.lane.b32.xlu0 %v791, 126
        %v826 = vpop.permute.xlu0 %825
        %827 = vrot.lane.b32.xlu0 %v792, 126
        %v828 = vpop.permute.xlu0 %827
        %829 = vrot.lane.b32.xlu0 %v793, 126
        %v830 = vpop.permute.xlu0 %829
        %v831 = vsel %vm608, %v828, %v830
        %v832 = vsel %vm608, %v826, %v828
        %v833 = vsel %vm608, %v830, %v826
        %v834 = vsel %vm625, %v832, -3.4028235e+38
        %v835 = vsel %vm626, %v831, -3.4028235e+38
        %v836 = vsel %vm627, %v833, -3.4028235e+38
        %v837 = vmax.f32 %v822, %v834
        %v838 = vmax.f32 %v823, %v835
        %v839 = vmax.f32 %v824, %v836
        %840 = vrot.lane.b32.xlu0 %v791, 2
        %v841 = vpop.permute.xlu0 %840
        %842 = vrot.lane.b32.xlu0 %v792, 2
        %v843 = vpop.permute.xlu0 %842
        %844 = vrot.lane.b32.xlu0 %v793, 2
        %v845 = vpop.permute.xlu0 %844
        %v846 = vsel %vm640, %v843, %v845
        %v847 = vsel %vm640, %v841, %v843
        %v848 = vsel %vm640, %v845, %v841
        %v849 = vsel %vm657, %v848, -3.4028235e+38
        %v850 = vsel %vm658, %v847, -3.4028235e+38
        %v851 = vsel %vm659, %v846, -3.4028235e+38
        %v852 = vmax.f32 %v837, %v849
        %v853 = vmax.f32 %v838, %v850
        %v854 = vmax.f32 %v839, %v851
        %855 = vrot.lane.b32.xlu0 %v852, 112
        %v856 = vpop.permute.xlu0 %855
        %857 = vrot.lane.b32.xlu0 %v853, 112
        %v858 = vpop.permute.xlu0 %857
        %859 = vrot.lane.b32.xlu0 %v854, 112
        %v860 = vpop.permute.xlu0 %859
        %v861 = vsel %vm672, %v858, %v860
        %v862 = vsel %vm672, %v856, %v858
        %v863 = vsel %vm672, %v860, %v856
        %v864 = vsel %vm689, %v862, -3.4028235e+38
        %v865 = vsel %vm690, %v861, -3.4028235e+38
        %v866 = vsel %vm691, %v863, -3.4028235e+38
        %v867 = vmax.f32 %v852, %v864
        %v868 = vmax.f32 %v853, %v865
        %v869 = vmax.f32 %v854, %v866
        %870 = vrot.lane.b32.xlu0 %v852, 16
        %v871 = vpop.permute.xlu0 %870
        %872 = vrot.lane.b32.xlu0 %v853, 16
        %v873 = vpop.permute.xlu0 %872
        %874 = vrot.lane.b32.xlu0 %v854, 16
        %v875 = vpop.permute.xlu0 %874
        %v876 = vsel %vm704, %v873, %v875
        %v877 = vsel %vm704, %v871, %v873
        %v878 = vsel %vm704, %v875, %v871
        %v879 = vsel %vm721, %v878, -3.4028235e+38
        %v880 = vsel %vm722, %v877, -3.4028235e+38
        %v881 = vsel %vm723, %v876, -3.4028235e+38
        %v882 = vmax.f32 %v867, %v879
        %v883 = vmax.f32 %v868, %v880
        %v884 = vmax.f32 %v869, %v881
        %885 = vrot.lane.b32.xlu0 %v852, 96
        %v886 = vpop.permute.xlu0 %885
        %887 = vrot.lane.b32.xlu0 %v853, 96
        %v888 = vpop.permute.xlu0 %887
        %889 = vrot.lane.b32.xlu0 %v854, 96
        %v890 = vpop.permute.xlu0 %889
        %v891 = vsel %vm736, %v888, %v890
        %v892 = vsel %vm736, %v886, %v888
        %v893 = vsel %vm736, %v890, %v886
        %v894 = vsel %vm753, %v892, -3.4028235e+38
        %v895 = vsel %vm754, %v891, -3.4028235e+38
        %v896 = vsel %vm755, %v893, -3.4028235e+38
        %v897 = vmax.f32 %v882, %v894
        %v898 = vmax.f32 %v883, %v895
        %v899 = vmax.f32 %v884, %v896
        %900 = vrot.lane.b32.xlu0 %v852, 32
        %v901 = vpop.permute.xlu0 %900
        %902 = vrot.lane.b32.xlu0 %v853, 32
        %v903 = vpop.permute.xlu0 %902
        %904 = vrot.lane.b32.xlu0 %v854, 32
        %v905 = vpop.permute.xlu0 %904
        %v906 = vsel %vm768, %v903, %v905
        %v907 = vsel %vm768, %v901, %v903
        %v908 = vsel %vm768, %v905, %v901
        %v909 = vsel %vm785, %v908, -3.4028235e+38
        %v910 = vsel %vm786, %v907, -3.4028235e+38
        %v911 = vsel %vm787, %v906, -3.4028235e+38
        %v912 = vmax.f32 %v897, %v909
        %v913 = vmax.f32 %v898, %v910
        %v914 = vmax.f32 %v899, %v911
        %915 = vst [vmem:[#allocation2 + $0x8] sm:$0xf] %v913
        %916 = vrot.lane.b32.xlu0 %v912, 127
        %v917 = vpop.permute.xlu0 %916
        %918 = vrot.lane.b32.xlu0 %v913, 127
        %v919 = vpop.permute.xlu0 %918
        %920 = vrot.lane.b32.xlu0 %v914, 127
        %v921 = vpop.permute.xlu0 %920
        %v922 = vsel %vm544, %v919, %v921
        %v923 = vsel %vm544, %v917, %v919
        %v924 = vsel %vm544, %v921, %v917
        %v925 = vsel %vm561, %v923, -3.4028235e+38
        %v926 = vsel %vm562, %v922, -3.4028235e+38
        %v927 = vsel %vm563, %v924, -3.4028235e+38
        %v928 = vmax.f32 %v912, %v925
        %v929 = vmax.f32 %v913, %v926
        %v930 = vmax.f32 %v914, %v927
        %931 = vrot.lane.b32.xlu0 %v912, 1
        %v932 = vpop.permute.xlu0 %931
        %933 = vrot.lane.b32.xlu0 %v913, 1
        %v934 = vpop.permute.xlu0 %933
        %935 = vrot.lane.b32.xlu0 %v914, 1
        %v936 = vpop.permute.xlu0 %935
        %v937 = vsel %vm576, %v934, %v936
        %v938 = vsel %vm576, %v932, %v934
        %v939 = vsel %vm576, %v936, %v932
        %v940 = vsel %vm593, %v939, -3.4028235e+38
        %v941 = vsel %vm594, %v938, -3.4028235e+38
        %v942 = vsel %vm595, %v937, -3.4028235e+38
        %v943 = vmax.f32 %v928, %v940
        %v944 = vmax.f32 %v929, %v941
        %v945 = vmax.f32 %v930, %v942
        %946 = vrot.lane.b32.xlu0 %v912, 126
        %v947 = vpop.permute.xlu0 %946
        %948 = vrot.lane.b32.xlu0 %v913, 126
        %v949 = vpop.permute.xlu0 %948
        %950 = vrot.lane.b32.xlu0 %v914, 126
        %v951 = vpop.permute.xlu0 %950
        %v952 = vsel %vm608, %v949, %v951
        %v953 = vsel %vm608, %v947, %v949
        %v954 = vsel %vm608, %v951, %v947
        %v955 = vsel %vm625, %v953, -3.4028235e+38
        %v956 = vsel %vm626, %v952, -3.4028235e+38
        %v957 = vsel %vm627, %v954, -3.4028235e+38
        %v958 = vmax.f32 %v943, %v955
        %v959 = vmax.f32 %v944, %v956
        %v960 = vmax.f32 %v945, %v957
        %961 = vrot.lane.b32.xlu0 %v912, 2
        %v962 = vpop.permute.xlu0 %961
        %963 = vrot.lane.b32.xlu0 %v913, 2
        %v964 = vpop.permute.xlu0 %963
        %965 = vrot.lane.b32.xlu0 %v914, 2
        %v966 = vpop.permute.xlu0 %965
        %v967 = vsel %vm640, %v964, %v966
        %v968 = vsel %vm640, %v962, %v964
        %v969 = vsel %vm640, %v966, %v962
        %v970 = vsel %vm657, %v969, -3.4028235e+38
        %v971 = vsel %vm658, %v968, -3.4028235e+38
        %v972 = vsel %vm659, %v967, -3.4028235e+38
        %v973 = vmax.f32 %v958, %v970
        %v974 = vmax.f32 %v959, %v971
        %v975 = vmax.f32 %v960, %v972
        %976 = vrot.lane.b32.xlu0 %v974, 112
        %v977 = vpop.permute.xlu0 %976
        %978 = vrot.lane.b32.xlu0 %v975, 112
        %v979 = vpop.permute.xlu0 %978
        %v980 = vsel %vm672, %v977, %v979
        %v981 = vsel %vm690, %v980, -3.4028235e+38
        %v982 = vmax.f32 %v974, %v981
        %983 = vrot.lane.b32.xlu0 %v973, 16
        %v984 = vpop.permute.xlu0 %983
        %985 = vrot.lane.b32.xlu0 %v974, 16
        %v986 = vpop.permute.xlu0 %985
        %v987 = vsel %vm704, %v984, %v986
        %v988 = vsel %vm722, %v987, -3.4028235e+38
        %v989 = vmax.f32 %v982, %v988
        %990 = vrot.lane.b32.xlu0 %v974, 96
        %v991 = vpop.permute.xlu0 %990
        %992 = vrot.lane.b32.xlu0 %v975, 96
        %v993 = vpop.permute.xlu0 %992
        %v994 = vsel %vm736, %v991, %v993
        %v995 = vsel %vm754, %v994, -3.4028235e+38
        %v996 = vmax.f32 %v989, %v995
        %997 = vrot.lane.b32.xlu0 %v973, 32
        %v998 = vpop.permute.xlu0 %997
        %999 = vrot.lane.b32.xlu0 %v974, 32
        %v1000 = vpop.permute.xlu0 %999
        %v1001 = vsel %vm768, %v998, %v1000
        %v1002 = vsel %vm786, %v1001, -3.4028235e+38
        %v1003 = vmax.f32 %v996, %v1002
        %1004 = vst [vmem:[#allocation2 + $0xc] sm:$0xf] %v1003
        %v1005 = vld [vmem:[%s5] sm:$0xff]
        %v1006 = vld [vmem:[#allocation2] sm:$0xff]
        %v1007 = vld [vmem:[#allocation2 + $0x8] sm:$0xff]
        %v1008 = vld [vmem:[%s6] sm:$0xff]
        %1010 = vset.pattern.permute.xlu0 0
        %1011 = vperm.xlu0 %1010, %v1008
        %v1012 = vpop.permute.xlu0 %1011
        %vm1014 = vcmask 130048
        %v1016 = vsel %vm1014, %v1005, 0
        %1018 = vmatprep.subr.mxu0 0.0
        %1019 = vmatpush1.msra.mxu0 %v1006
        %1020 = vmatprep.subr.mxu0 0.0
        %1021 = vmatpush1.msra.mxu0 %v1007
        %1022 = vmatprep.subr.mxu0 0.0
        %1023 = vmatpush1.msra.mxu0 0.0
        %1024 = vmatprep.subr.mxu0 0.0
        %1025 = vmatpush1.msra.mxu0 0.0
        %1026 = vmatprep.subr.mxu0 0.0
        %1027 = vmatpush1.msra.mxu0 0.0
        %1028 = vmatprep.subr.mxu0 0.0
        %1029 = vmatpush1.msra.mxu0 0.0
        %1030 = vmatprep.subr.mxu0 0.0
        %1031 = vmatpush1.msra.mxu0 0.0
        %1032 = vmatprep.subr.mxu0 0.0
        %1033 = vmatpush1.msra.mxu0 0.0
        %1034 = vmatprep.subr.mxu0 0.0
        %1035 = vmatpush1.msra.mxu0 0.0
        %1036 = vmatprep.subr.mxu0 0.0
        %1037 = vmatpush1.msra.mxu0 0.0
        %1038 = vmatprep.subr.mxu0 0.0
        %1039 = vmatpush1.msra.mxu0 0.0
        %1040 = vmatprep.subr.mxu0 0.0
        %1041 = vmatpush1.msra.mxu0 0.0
        %1042 = vmatprep.subr.mxu0 0.0
        %1043 = vmatpush1.msra.mxu0 0.0
        %1044 = vmatprep.subr.mxu0 0.0
        %1045 = vmatpush1.msra.mxu0 0.0
        %1046 = vmatprep.subr.mxu0 0.0
        %1047 = vmatpush1.msra.mxu0 0.0
        %1048 = vmatprep.subr.mxu0 0.0
        %1049 = vmatpush1.msra.mxu0 0.0
        %1050 = vmatprep.subr.mxu0 0.0
        %1051 = vmatpush1.msra.mxu0 0.0
        %1052 = vmatprep.subr.mxu0 0.0
        %1053 = vmatpush1.msra.mxu0 0.0
        %1054 = vmatprep.subr.mxu0 0.0
        %1055 = vmatpush1.msra.mxu0 0.0
        %1056 = vmatprep.subr.mxu0 0.0
        %1057 = vmatpush1.msra.mxu0 0.0
        %1058 = vmatprep.subr.mxu0 0.0
        %1059 = vmatpush1.msra.mxu0 0.0
        %1060 = vmatprep.subr.mxu0 0.0
        %1061 = vmatpush1.msra.mxu0 0.0
        %1062 = vmatprep.subr.mxu0 0.0
        %1063 = vmatpush1.msra.mxu0 0.0
        %1064 = vmatprep.subr.mxu0 0.0
        %1065 = vmatpush1.msra.mxu0 0.0
        %1066 = vmatprep.subr.mxu0 0.0
        %1067 = vmatpush1.msra.mxu0 0.0
        %1068 = vmatprep.subr.mxu0 0.0
        %1069 = vmatpush1.msra.mxu0 0.0
        %1070 = vmatprep.subr.mxu0 0.0
        %1071 = vmatpush1.msra.mxu0 0.0
        %1072 = vmatprep.subr.mxu0 0.0
        %1073 = vmatpush1.msra.mxu0 0.0
        %1074 = vmatprep.subr.mxu0 0.0
        %1075 = vmatpush1.msra.mxu0 0.0
        %1076 = vmatprep.subr.mxu0 0.0
        %1077 = vmatpush1.msra.mxu0 0.0
        %1078 = vmatprep.subr.mxu0 0.0
        %1079 = vmatpush1.msra.mxu0 0.0
        %1080 = vmatprep.subr.mxu0 0.0
        %1081 = vmatpush1.msra.mxu0 0.0
        %1082 = vmatprep.mubr.f32.mxu0 0.0
        %1083 = vmatmul.mubr.f32.gmra.mrb[0].mxu0 %v1016
        %v1084 = vpop.f32.mrb[0].mxu0
        %v1085 = vadd.f32 %v1012, %v1084
        %v1086 = vpop.f32.mrb[0].mxu0
        %1087 = vdwg.mxu0
        %v1088 = vsub.f32 0.0, %v1085
        %v1089 = vmul.f32 %v1088, 1.442695
        %v1090 = vpow.pop %v1089
        %v1091 = vadd.f32 %v1090, 1.0
        %v1092 = vrcp.pop %v1091
        %v1093 = vmul.f32 %v1085, %v1092
        %1094 = vst [vmem:[%s321] sm:$0xff] %v1093
        %s1095 = sand.u32 %s199, 1
        %s1096 = scalar_lea.sflag [#allocation5], %s1095
        %s1097 = sand.u32 %s199, 1
        %s1098 = smul.addr %s1097, 8
        %s1099 = scalar_lea.vmem [#allocation8], %s1098
        // Predicated region
        $region57: #{tpu_custom_call.1} parent=47 // pred_check
          %p1100 = pneg %p209
        $region58: #{tpu_custom_call.1} parent=47 // pred_check_branch
          %1102 = sbr.rel (%p1100) target = $region60
        $region59: #{tpu_custom_call.1} parent=47 // pred_region
          %s1104 = ssub.s32 128, 128
          %1105 = vsyncadd %s1096, %s1104
          %s1106 = smul.addr %s29, 2
          %s1107 = sadd.s32 %s30, %s1106
          %s1108 = smul.addr %s1107, 128
          %s1109 = scalar_lea.hbm %s7, %s1108
          %s1111 = sshll.u32 %s1099, 4
          %s1112 = int_to_ptr.vmem [resolvable:$true] %s1111
          %1114 = dma.vmem_to_hbm [thread:$0]  %s1112, 128, %s1109, %s1096
        $region60: #{tpu_custom_call.1} parent=47 // pred_fallthru
          _
      $region48: #{tpu_custom_call.1} parent=5 // pred_fallthru
        _
      %p1115 = scmp.le.s32.totalorder 2, %s20
      // Predicated region
      $region61: #{tpu_custom_call.1} parent=5 // pred_check
        %p1116 = pneg %p1115
      $region62: #{tpu_custom_call.1} parent=5 // pred_check_branch
        %1118 = sbr.rel (%p1116) target = $region64
      $region63: #{tpu_custom_call.1} parent=5 // pred_region
        %s1119 = ssub.s32 %s20, 2
        // Predicated region
        $region65: #{tpu_custom_call.1} parent=63 // pred_check
          %p1120 = pneg %p215
        $region66: #{tpu_custom_call.1} parent=63 // pred_check_branch
          %1122 = sbr.rel (%p1120) target = $region68
        $region67: #{tpu_custom_call.1} parent=63 // pred_region
          %s1123 = sand.u32 %s200, 1
          %s1124 = scalar_lea.sflag [#allocation5], %s1123
          %s1125 = sand.u32 %s200, 1
          %s1126 = smul.addr %s1125, 8
          %s1127 = scalar_lea.vmem [#allocation8], %s1126
          %1128 = dma.done %s1124, 128
        $region68: #{tpu_custom_call.1} parent=63 // pred_fallthru
          _
      $region64: #{tpu_custom_call.1} parent=5 // pred_fallthru
        _
    $region6: #{tpu_custom_call.1} parent=1 // loop_footer
      %s24 = sadd.s32 1, %s20
    $region7: #{tpu_custom_call.1} parent=1 // loop_footer_branch
      %19 = sbr.rel target = $region3
    $region8: #{tpu_custom_call.1} parent=1 // loop_exit
      _
    %1129 = vsyncpa [#allocation4], 1
    %s1130 = scalar_lea.sflag [#allocation4], 1
    %1131 = vsyncpa %s1130, 1
    %1132 = vsyncpa [#allocation7], 1
    %s1133 = scalar_lea.sflag [#allocation7], 1
    %1134 = vsyncpa %s1133, 1
    %1135 = vsyncpa [#allocation5], 1
    %s1136 = scalar_lea.sflag [#allocation5], 1
    %1137 = vsyncpa %s1136, 1

</llo_original>
